<compile_context>
chip_gen: v7x
topology: tpu7x:2x2x1
jax: 0.10.0
libtpu: 0.0.40
codegen_flags: <defaults>
</compile_context>

<pallas_src>
import jax
import jax.numpy as jnp
from jax.experimental import pallas as pl
from jax.experimental.pallas import tpu as pltpu


# ----------------------------------------------------------------------------
# trace-time helpers (tiny, run once per shape under jit)
# ----------------------------------------------------------------------------
def _fold_bn_into_conv(w_oi, gamma, beta, mean, var, eps=1e-5):
    """Fold inference BatchNorm into the 1x1-conv weight (bf16) + per-channel shift (f32)."""
    scale = gamma / jnp.sqrt(var + eps)                           # (Cout,)
    w_folded = (w_oi * scale[:, None]).astype(jnp.bfloat16)       # (Cout, Cin) bf16 MXU input
    shift = (beta - mean * scale).astype(jnp.float32)[:, None]    # (Cout, 1)  f32
    return w_folded, shift


def _interp_matrix(out_size, in_size, dtype=jnp.float32):
    """1-D align_corners=True bilinear interpolation matrix (out_size, in_size)."""
    if out_size == 1:
        src = jnp.zeros((1,), dtype)
    else:
        src = jnp.arange(out_size, dtype=dtype) * (in_size - 1) / (out_size - 1)
    i0 = jnp.clip(jnp.floor(src), 0, in_size - 1).astype(jnp.int32)
    i1 = jnp.minimum(i0 + 1, in_size - 1)
    w = src - i0.astype(dtype)
    m = (jax.nn.one_hot(i0, in_size, dtype=dtype) * (1.0 - w)[:, None]
         + jax.nn.one_hot(i1, in_size, dtype=dtype) * w[:, None])
    return m  # (out_size, in_size)


def _resize_matrix_flat(out_h, out_w, in_h, in_w, dtype=jnp.float32):
    """Flattened (HWin, HWout) align_corners bilinear matrix: y_flat @ R == resize(y)."""
    ry = _interp_matrix(out_h, in_h, dtype)   # (Ho, Hin)
    rx = _interp_matrix(out_w, in_w, dtype)   # (Wo, Win)
    r = jnp.einsum("ah,bw->hwab", ry, rx).reshape(in_h * in_w, out_h * out_w)
    return r


def _vmem_capacity_bytes():
    """Physical VMEM of the current chip; conservative fallback = v7x's 64 MiB."""
    try:
        return int(pltpu.get_tpu_info().vmem_capacity_bytes)
    except Exception:
        return 64 << 20


def _pick_out_tile(hwo, per_pixel_bytes, fixed_bytes, budget_bytes):
    """Output-spatial tile: multiple of 128, >=2 tiles per batch element when possible,
    largest such divisor whose (already double-buffer-counted) footprint fits budget."""
    if hwo <= 128 or hwo % 128 != 0:
        return hwo                                   # full extent is always legal
    cap = max(budget_bytes - fixed_bytes, 0) // max(per_pixel_bytes, 1)
    best = 128
    d = 128
    while d <= hwo // 2:
        if hwo % d == 0 and d <= cap:
            best = d
        d += 128
    return best


# ----------------------------------------------------------------------------
# Fused FeatureFused forward: one pallas_call
# ----------------------------------------------------------------------------
@jax.jit
def feature_fused_forward(c2, c3, c4, params):
    N, C2, H2, W2 = c2.shape
    _, C3, H3, W3 = c3.shape
    _, C4, Ho, Wo = c4.shape
    Cb = params["conv2_w"].shape[0]
    Ctot = C4 + 2 * Cb
    HW2, HW3, HWo = H2 * W2, H3 * W3, Ho * Wo

    # BN folded into bf16 conv weights + f32 shifts; bf16 flattened resize matrices.
    w2, s2 = _fold_bn_into_conv(params["conv2_w"], params["bn2_gamma"],
                                params["bn2_beta"], params["bn2_mean"], params["bn2_var"])
    w3, s3 = _fold_bn_into_conv(params["conv3_w"], params["bn3_gamma"],
                                params["bn3_beta"], params["bn3_mean"], params["bn3_var"])
    r2 = _resize_matrix_flat(Ho, Wo, H2, W2).astype(jnp.bfloat16)   # (HW2, HWo)
    r3 = _resize_matrix_flat(Ho, Wo, H3, W3).astype(jnp.bfloat16)   # (HW3, HWo)

    # Free reshapes only; inputs stay f32 in HBM (cast to bf16 happens inside the kernel).
    c2f = c2.reshape(N, C2, HW2)
    c3f = c3.reshape(N, C3, HW3)
    c4f = c4.reshape(N, C4, HWo)
    out_dtype = c4.dtype

    # ---- VMEM budgeting: 2x double-buffered blocks + persistent bf16 scratch --------
    vmem_cap = _vmem_capacity_bytes()
    budget = min(vmem_cap // 2, 48 << 20)
    per_pixel = 2 * (C4 * 4 + Ctot * 4 + HW2 * 2 + HW3 * 2)     # bytes per out pixel (dbl-buf)
    fixed = (2 * 4 * (C2 * HW2 + C3 * HW3)                      # low-res f32 input blocks
             + 2 * 2 * (Cb * C2 + Cb * C3) + 2 * 4 * 2 * Cb     # weights + shifts
             + 2 * Cb * (HW2 + HW3))                            # bf16 conv-result scratch
    two = _pick_out_tile(HWo, per_pixel, fixed, budget)
    n_tiles = HWo // two
    vmem_limit = int(min(max(fixed + per_pixel * two + (4 << 20), 32 << 20), vmem_cap))

    def kernel(c2_ref, c3_ref, c4_ref, w2_ref, s2_ref, r2_ref,
               w3_ref, s3_ref, r3_ref, o_ref, y2_sc, y3_sc):
        # First output tile of each batch element: run both 1x1 convs (+ folded-BN shift)
        # at LOW resolution; park 48-ch results in VMEM scratch (bf16) for reuse.
        @pl.when(pl.program_id(1) == 0)
        def _():
            y2 = jnp.dot(w2_ref[...], c2_ref[0].astype(jnp.bfloat16),   # in-kernel cast
                         preferred_element_type=jnp.float32) + s2_ref[...]
            y3 = jnp.dot(w3_ref[...], c3_ref[0].astype(jnp.bfloat16),
                         preferred_element_type=jnp.float32) + s3_ref[...]
            y2_sc[...] = y2.astype(jnp.bfloat16)
            y3_sc[...] = y3.astype(jnp.bfloat16)

        # Every output tile: bilinear resize = one bf16 MXU dot per branch, ReLU, and a
        # lane-dense write of the concat slab [c4 | relu(conv3) | relu(conv2)].
        o_ref[:, 0:C4, :] = c4_ref[...].astype(o_ref.dtype)
        res3 = jnp.dot(y3_sc[...], r3_ref[...], preferred_element_type=jnp.float32)
        o_ref[:, C4:C4 + Cb, :] = jnp.maximum(res3, 0.0).astype(o_ref.dtype)[None]
        res2 = jnp.dot(y2_sc[...], r2_ref[...], preferred_element_type=jnp.float32)
        o_ref[:, C4 + Cb:Ctot, :] = jnp.maximum(res2, 0.0).astype(o_ref.dtype)[None]

    out = pl.pallas_call(
        kernel,
        out_shape=jax.ShapeDtypeStruct((N, Ctot, HWo), out_dtype),
        grid=(N, n_tiles),
        in_specs=[
            pl.BlockSpec((1, C2, HW2), lambda n, j: (n, 0, 0)),   # resident across j (no re-DMA)
            pl.BlockSpec((1, C3, HW3), lambda n, j: (n, 0, 0)),
            pl.BlockSpec((1, C4, two), lambda n, j: (n, 0, j)),
            pl.BlockSpec((Cb, C2), lambda n, j: (0, 0)),
            pl.BlockSpec((Cb, 1), lambda n, j: (0, 0)),
            pl.BlockSpec((HW2, two), lambda n, j: (0, j)),
            pl.BlockSpec((Cb, C3), lambda n, j: (0, 0)),
            pl.BlockSpec((Cb, 1), lambda n, j: (0, 0)),
            pl.BlockSpec((HW3, two), lambda n, j: (0, j)),
        ],
        out_specs=pl.BlockSpec((1, Ctot, two), lambda n, j: (n, 0, j)),
        scratch_shapes=[pltpu.VMEM((Cb, HW2), jnp.bfloat16),
                        pltpu.VMEM((Cb, HW3), jnp.bfloat16)],
        compiler_params=pltpu.CompilerParams(
            dimension_semantics=("parallel", "arbitrary"),
            vmem_limit_bytes=vmem_limit),
    )(c2f, c3f, c4f, w2, s2, r2, w3, s3, r3)
    return out.reshape(N, Ctot, Ho, Wo)


# ----------------------------------------------------------------------------
# Pure-JAX references for correctness checks
# ----------------------------------------------------------------------------
def _branch_samepath_ref(x, w_oi, gamma, beta, mean, var, out_h, out_w):
    """Same reordered / bf16 math as the Pallas path (tight-tolerance kernel check)."""
    w_bf16, shift = _fold_bn_into_conv(w_oi, gamma, beta, mean, var)
    N, Cin, H, W = x.shape
    r = _resize_matrix_flat(out_h, out_w, H, W).astype(jnp.bfloat16)
    y = jnp.einsum("oc,ncp->nop", w_bf16, x.reshape(N, Cin, H * W).astype(jnp.bfloat16),
                   preferred_element_type=jnp.float32) + shift[None]
    y = y.astype(jnp.bfloat16)
    yr = jnp.einsum("nop,pq->noq", y, r, preferred_element_type=jnp.float32)
    yr = jnp.maximum(yr, 0.0).reshape(N, -1, out_h, out_w)
    return yr


def feature_fused_samepath_ref(c2, c3, c4, params):
    Ho, Wo = c4.shape[2], c4.shape[3]
    y2 = _branch_samepath_ref(c2, params["conv2_w"], params["bn2_gamma"],
                              params["bn2_beta"], params["bn2_mean"],
                              params["bn2_var"], Ho, Wo)
    y3 = _branch_samepath_ref(c3, params["conv3_w"], params["bn3_gamma"],
                              params["bn3_beta"], params["bn3_mean"],
                              params["bn3_var"], Ho, Wo)
    return jnp.concatenate([c4, y3, y2], axis=1)


def _resize_bilinear_nchw_f32(x, out_h, out_w):
    _, _, H, W = x.shape
    if (H, W) == (out_h, out_w):
        return x
    ry = _interp_matrix(out_h, H, x.dtype)
    rx = _interp_matrix(out_w, W, x.dtype)
    return jnp.einsum("ah,nchw,bw->ncab", ry, x, rx)


def feature_fused_reference(c2, c3, c4, params):
    """Original PyTorch ordering (resize -> conv -> BN -> ReLU), full f32."""
    Ho, Wo = c4.shape[2], c4.shape[3]

    def branch(x, w, g, b, m, v):
        xr = _resize_bilinear_nchw_f32(x, Ho, Wo)
        y = jnp.einsum("oc,nchw->nohw", w, xr)
        scale = g / jnp.sqrt(v + 1e-5)
        shift = b - m * scale
        y = y * scale[None, :, None, None] + shift[None, :, None, None]
        return jnp.maximum(y, 0.0)

    y2 = branch(c2, params["conv2_w"], params["bn2_gamma"], params["bn2_beta"],
                params["bn2_mean"], params["bn2_var"])
    y3 = branch(c3, params["conv3_w"], params["bn3_gamma"], params["bn3_beta"],
                params["bn3_mean"], params["bn3_var"])
    return jnp.concatenate([c4, y3, y2], axis=1)


# ----------------------------------------------------------------------------
# Main
# ----------------------------------------------------------------------------
if __name__ == "__main__":
    key = jax.random.PRNGKey(0)
    ks = jax.random.split(key, 12)

    inter_channels = 48
    N = 2
    # c2: 512-ch, c3: 1024-ch (fixed by the module); c4 arbitrary (64-ch here).
    c2 = jax.random.normal(ks[0], (N, 512, 8, 8), jnp.float32)
    c3 = jax.random.normal(ks[1], (N, 1024, 8, 8), jnp.float32)
    c4 = jax.random.normal(ks[2], (N, 64, 16, 16), jnp.float32)

    params = {
        "conv2_w": jax.random.normal(ks[3], (inter_channels, 512), jnp.float32) * 0.05,
        "conv3_w": jax.random.normal(ks[4], (inter_channels, 1024), jnp.float32) * 0.05,
        "bn2_gamma": 1.0 + 0.1 * jax.random.normal(ks[5], (inter_channels,), jnp.float32),
        "bn2_beta": 0.1 * jax.random.normal(ks[6], (inter_channels,), jnp.float32),
        "bn2_mean": 0.1 * jax.random.normal(ks[7], (inter_channels,), jnp.float32),
        "bn2_var": jnp.abs(jax.random.normal(ks[8], (inter_channels,), jnp.float32)) + 0.5,
        "bn3_gamma": 1.0 + 0.1 * jax.random.normal(ks[9], (inter_channels,), jnp.float32),
        "bn3_beta": 0.1 * jax.random.normal(ks[10], (inter_channels,), jnp.float32),
        "bn3_mean": 0.1 * jax.random.normal(ks[11], (inter_channels,), jnp.float32),
        "bn3_var": jnp.abs(jax.random.normal(ks[5], (inter_channels,), jnp.float32)) + 0.5,
    }

    out = jax.block_until_ready(feature_fused_forward(c2, c3, c4, params))
    assert out.shape == (N, 64 + 2 * inter_channels, 16, 16), out.shape

    # 1) tight check vs a pure-JAX implementation of the SAME (reordered, bf16-MXU)
    #    math — validates the fused Pallas kernel itself.
    ref_same = feature_fused_samepath_ref(c2, c3, c4, params)
    assert jnp.allclose(out, ref_same, atol=2e-3, rtol=2e-3), "mismatch vs same-path ref"

    # 2) loose check vs the ORIGINAL PyTorch ordering in full f32 — validates that the
    #    conv-before-resize reorder + bf16 folding preserve module semantics (bf16-level
    #    tolerance is intended precision).
    ref_orig = feature_fused_reference(c2, c3, c4, params)
    assert jnp.allclose(out, ref_orig, atol=2e-1, rtol=5e-2), "mismatch vs original-order ref"

    print("KERNEL_OK")
</pallas_src>

<mosaic_0001>
module attributes {stable_mosaic.version = 11 : i64} {
  func.func @kernel(%arg0: i32, %arg1: i32, %arg2: memref<1x512x64xf32, #tpu.memory_space<vmem>>, %arg3: memref<1x1024x64xf32, #tpu.memory_space<vmem>>, %arg4: memref<1x64x128xf32, #tpu.memory_space<vmem>>, %arg5: memref<48x512xbf16, #tpu.memory_space<vmem>>, %arg6: memref<48x1xf32, #tpu.memory_space<vmem>>, %arg7: memref<64x128xbf16, #tpu.memory_space<vmem>>, %arg8: memref<48x1024xbf16, #tpu.memory_space<vmem>>, %arg9: memref<48x1xf32, #tpu.memory_space<vmem>>, %arg10: memref<64x128xbf16, #tpu.memory_space<vmem>>, %arg11: memref<1x160x128xf32, #tpu.memory_space<vmem>>, %arg12: memref<48x64xbf16, #tpu.memory_space<vmem>>, %arg13: memref<48x64xbf16, #tpu.memory_space<vmem>>) attributes {dimension_semantics = [#tpu.dimension_semantics<parallel>, #tpu.dimension_semantics<arbitrary>], iteration_bounds = array<i64: 2, 2>, scalar_prefetch = 0 : i64, scratch_operands = 2 : i64, tpu.core_type = #tpu.core_type<tc>, window_params = [{transform_indices = @transform_0, window_bounds = array<i64: 1, 512, 64>}, {transform_indices = @transform_1, window_bounds = array<i64: 1, 1024, 64>}, {transform_indices = @transform_2, window_bounds = array<i64: 1, 64, 128>}, {pipeline_mode = #tpu.pipeline_mode<synchronous>, transform_indices = @transform_3, window_bounds = array<i64: 48, 512>}, {pipeline_mode = #tpu.pipeline_mode<synchronous>, transform_indices = @transform_4, window_bounds = array<i64: 48, 1>}, {transform_indices = @transform_5, window_bounds = array<i64: 64, 128>}, {pipeline_mode = #tpu.pipeline_mode<synchronous>, transform_indices = @transform_6, window_bounds = array<i64: 48, 1024>}, {pipeline_mode = #tpu.pipeline_mode<synchronous>, transform_indices = @transform_7, window_bounds = array<i64: 48, 1>}, {transform_indices = @transform_8, window_bounds = array<i64: 64, 128>}, {transform_indices = @transform_9, window_bounds = array<i64: 1, 160, 128>}]} {
    %c0_i32 = arith.constant 0 : i32
    %0 = arith.cmpi eq, %arg1, %c0_i32 : i32
    %1 = arith.extui %0 : i1 to i32
    %c0_i32_0 = arith.constant 0 : i32
    %2 = arith.cmpi ne, %1, %c0_i32_0 : i32
    scf.if %2 {
      %c0_21 = arith.constant 0 : index
      %c0_22 = arith.constant 0 : index
      %19 = vector.load %arg5[%c0_21, %c0_22] : memref<48x512xbf16, #tpu.memory_space<vmem>>, vector<48x512xbf16>
      %c0_23 = arith.constant 0 : index
      %c0_24 = arith.constant 0 : index
      %c0_25 = arith.constant 0 : index
      %20 = vector.load %arg2[%c0_23, %c0_24, %c0_25] : memref<1x512x64xf32, #tpu.memory_space<vmem>>, vector<1x512x64xf32>
      %21 = vector.shape_cast %20 : vector<1x512x64xf32> to vector<512x64xf32>
      %22 = arith.truncf %21 : vector<512x64xf32> to vector<512x64xbf16>
      %cst_26 = arith.constant dense<0.000000e+00> : vector<48x64xf32>
      %23 = tpu.matmul %19, %22, %cst_26 {dimension_numbers = #tpu.dot_dimension_numbers<[1], [0], [0], [1], [0, 0, 1, 1], [], []>} : vector<48x512xbf16>, vector<512x64xbf16>, vector<48x64xf32> -> vector<48x64xf32>
      %c0_27 = arith.constant 0 : index
      %c0_28 = arith.constant 0 : index
      %24 = vector.load %arg6[%c0_27, %c0_28] : memref<48x1xf32, #tpu.memory_space<vmem>>, vector<48x1xf32>
      %25 = vector.broadcast %24 : vector<48x1xf32> to vector<48x64xf32>
      %26 = arith.addf %23, %25 : vector<48x64xf32>
      %c0_29 = arith.constant 0 : index
      %c0_30 = arith.constant 0 : index
      %27 = vector.load %arg8[%c0_29, %c0_30] : memref<48x1024xbf16, #tpu.memory_space<vmem>>, vector<48x1024xbf16>
      %c0_31 = arith.constant 0 : index
      %c0_32 = arith.constant 0 : index
      %c0_33 = arith.constant 0 : index
      %28 = vector.load %arg3[%c0_31, %c0_32, %c0_33] : memref<1x1024x64xf32, #tpu.memory_space<vmem>>, vector<1x1024x64xf32>
      %29 = vector.shape_cast %28 : vector<1x1024x64xf32> to vector<1024x64xf32>
      %30 = arith.truncf %29 : vector<1024x64xf32> to vector<1024x64xbf16>
      %cst_34 = arith.constant dense<0.000000e+00> : vector<48x64xf32>
      %31 = tpu.matmul %27, %30, %cst_34 {dimension_numbers = #tpu.dot_dimension_numbers<[1], [0], [0], [1], [0, 0, 1, 1], [], []>} : vector<48x1024xbf16>, vector<1024x64xbf16>, vector<48x64xf32> -> vector<48x64xf32>
      %c0_35 = arith.constant 0 : index
      %c0_36 = arith.constant 0 : index
      %32 = vector.load %arg9[%c0_35, %c0_36] : memref<48x1xf32, #tpu.memory_space<vmem>>, vector<48x1xf32>
      %33 = vector.broadcast %32 : vector<48x1xf32> to vector<48x64xf32>
      %34 = arith.addf %31, %33 : vector<48x64xf32>
      %35 = arith.truncf %26 : vector<48x64xf32> to vector<48x64xbf16>
      %c0_37 = arith.constant 0 : index
      %c0_38 = arith.constant 0 : index
      %36 = vector.load %arg12[%c0_37, %c0_38] : memref<48x64xbf16, #tpu.memory_space<vmem>>, vector<48x64xbf16>
      tpu.vector_store %arg12[%c0_37, %c0_38], %35 {strides = array<i32>} : memref<48x64xbf16, #tpu.memory_space<vmem>>, vector<48x64xbf16>,
      %37 = arith.truncf %34 : vector<48x64xf32> to vector<48x64xbf16>
      %c0_39 = arith.constant 0 : index
      %c0_40 = arith.constant 0 : index
      %38 = vector.load %arg13[%c0_39, %c0_40] : memref<48x64xbf16, #tpu.memory_space<vmem>>, vector<48x64xbf16>
      tpu.vector_store %arg13[%c0_39, %c0_40], %37 {strides = array<i32>} : memref<48x64xbf16, #tpu.memory_space<vmem>>, vector<48x64xbf16>,
    } else {
    }
    %c0 = arith.constant 0 : index
    %c0_1 = arith.constant 0 : index
    %c0_2 = arith.constant 0 : index
    %3 = vector.load %arg4[%c0, %c0_1, %c0_2] : memref<1x64x128xf32, #tpu.memory_space<vmem>>, vector<1x64x128xf32>
    %c0_3 = arith.constant 0 : index
    %c0_4 = arith.constant 0 : index
    %c0_5 = arith.constant 0 : index
    %4 = vector.load %arg11[%c0_3, %c0_4, %c0_5] : memref<1x160x128xf32, #tpu.memory_space<vmem>>, vector<1x64x128xf32>
    tpu.vector_store %arg11[%c0_3, %c0_4, %c0_5], %3 {strides = array<i32>} : memref<1x160x128xf32, #tpu.memory_space<vmem>>, vector<1x64x128xf32>,
    %c0_6 = arith.constant 0 : index
    %c0_7 = arith.constant 0 : index
    %5 = vector.load %arg13[%c0_6, %c0_7] : memref<48x64xbf16, #tpu.memory_space<vmem>>, vector<48x64xbf16>
    %c0_8 = arith.constant 0 : index
    %c0_9 = arith.constant 0 : index
    %6 = vector.load %arg10[%c0_8, %c0_9] : memref<64x128xbf16, #tpu.memory_space<vmem>>, vector<64x128xbf16>
    %cst = arith.constant dense<0.000000e+00> : vector<48x128xf32>
    %7 = tpu.matmul %5, %6, %cst {dimension_numbers = #tpu.dot_dimension_numbers<[1], [0], [0], [1], [0, 0, 1, 1], [], []>} : vector<48x64xbf16>, vector<64x128xbf16>, vector<48x128xf32> -> vector<48x128xf32>
    %cst_10 = arith.constant 0.000000e+00 : f32
    %8 = vector.broadcast %cst_10 : f32 to vector<48x128xf32>
    %9 = arith.maximumf %7, %8 : vector<48x128xf32>
    %10 = vector.shape_cast %9 : vector<48x128xf32> to vector<1x48x128xf32>
    %c0_11 = arith.constant 0 : index
    %c64 = arith.constant 64 : index
    %c0_12 = arith.constant 0 : index
    %11 = vector.load %arg11[%c0_11, %c64, %c0_12] : memref<1x160x128xf32, #tpu.memory_space<vmem>>, vector<1x48x128xf32>
    tpu.vector_store %arg11[%c0_11, %c64, %c0_12], %10 {strides = array<i32>} : memref<1x160x128xf32, #tpu.memory_space<vmem>>, vector<1x48x128xf32>,
    %c0_13 = arith.constant 0 : index
    %c0_14 = arith.constant 0 : index
    %12 = vector.load %arg12[%c0_13, %c0_14] : memref<48x64xbf16, #tpu.memory_space<vmem>>, vector<48x64xbf16>
    %c0_15 = arith.constant 0 : index
    %c0_16 = arith.constant 0 : index
    %13 = vector.load %arg7[%c0_15, %c0_16] : memref<64x128xbf16, #tpu.memory_space<vmem>>, vector<64x128xbf16>
    %cst_17 = arith.constant dense<0.000000e+00> : vector<48x128xf32>
    %14 = tpu.matmul %12, %13, %cst_17 {dimension_numbers = #tpu.dot_dimension_numbers<[1], [0], [0], [1], [0, 0, 1, 1], [], []>} : vector<48x64xbf16>, vector<64x128xbf16>, vector<48x128xf32> -> vector<48x128xf32>
    %cst_18 = arith.constant 0.000000e+00 : f32
    %15 = vector.broadcast %cst_18 : f32 to vector<48x128xf32>
    %16 = arith.maximumf %14, %15 : vector<48x128xf32>
    %17 = vector.shape_cast %16 : vector<48x128xf32> to vector<1x48x128xf32>
    %c0_19 = arith.constant 0 : index
    %c112 = arith.constant 112 : index
    %c0_20 = arith.constant 0 : index
    %18 = vector.load %arg11[%c0_19, %c112, %c0_20] : memref<1x160x128xf32, #tpu.memory_space<vmem>>, vector<1x48x128xf32>
    tpu.vector_store %arg11[%c0_19, %c112, %c0_20], %17 {strides = array<i32>} : memref<1x160x128xf32, #tpu.memory_space<vmem>>, vector<1x48x128xf32>,
    return
  }
  func.func @transform_0(%arg0: i32, %arg1: i32) -> (i32, i32, i32) {
    %c0_i32 = arith.constant 0 : i32
    %c0_i32_0 = arith.constant 0 : i32
    %c0_i32_1 = arith.constant 0 : i32
    return %arg0, %c0_i32, %c0_i32_0 : i32, i32, i32
  }
  func.func @transform_1(%arg0: i32, %arg1: i32) -> (i32, i32, i32) {
    %c0_i32 = arith.constant 0 : i32
    %c0_i32_0 = arith.constant 0 : i32
    %c0_i32_1 = arith.constant 0 : i32
    return %arg0, %c0_i32, %c0_i32_0 : i32, i32, i32
  }
  func.func @transform_2(%arg0: i32, %arg1: i32) -> (i32, i32, i32) {
    %c0_i32 = arith.constant 0 : i32
    %c0_i32_0 = arith.constant 0 : i32
    return %arg0, %c0_i32, %arg1 : i32, i32, i32
  }
  func.func @transform_3(%arg0: i32, %arg1: i32) -> (i32, i32) {
    %c0_i32 = arith.constant 0 : i32
    %c0_i32_0 = arith.constant 0 : i32
    %c0_i32_1 = arith.constant 0 : i32
    return %c0_i32, %c0_i32_0 : i32, i32
  }
  func.func @transform_4(%arg0: i32, %arg1: i32) -> (i32, i32) {
    %c0_i32 = arith.constant 0 : i32
    %c0_i32_0 = arith.constant 0 : i32
    %c0_i32_1 = arith.constant 0 : i32
    return %c0_i32, %c0_i32_0 : i32, i32
  }
  func.func @transform_5(%arg0: i32, %arg1: i32) -> (i32, i32) {
    %c0_i32 = arith.constant 0 : i32
    %c0_i32_0 = arith.constant 0 : i32
    return %c0_i32, %arg1 : i32, i32
  }
  func.func @transform_6(%arg0: i32, %arg1: i32) -> (i32, i32) {
    %c0_i32 = arith.constant 0 : i32
    %c0_i32_0 = arith.constant 0 : i32
    %c0_i32_1 = arith.constant 0 : i32
    return %c0_i32, %c0_i32_0 : i32, i32
  }
  func.func @transform_7(%arg0: i32, %arg1: i32) -> (i32, i32) {
    %c0_i32 = arith.constant 0 : i32
    %c0_i32_0 = arith.constant 0 : i32
    %c0_i32_1 = arith.constant 0 : i32
    return %c0_i32, %c0_i32_0 : i32, i32
  }
  func.func @transform_8(%arg0: i32, %arg1: i32) -> (i32, i32) {
    %c0_i32 = arith.constant 0 : i32
    %c0_i32_0 = arith.constant 0 : i32
    return %c0_i32, %arg1 : i32, i32
  }
  func.func @transform_9(%arg0: i32, %arg1: i32) -> (i32, i32, i32) {
    %c0_i32 = arith.constant 0 : i32
    %c0_i32_0 = arith.constant 0 : i32
    return %arg0, %c0_i32, %arg1 : i32, i32, i32
  }
}

</mosaic_0001>

<llo_original>
// kernel: feature_fused_forward.1
$region0: #{feature_fused_forward.1}
  #allocation0 [shape = 'u32[]', space=smem, size = 0x4, offset = 0x4, fixed_abs, tag = 'smem constant byte address 0x4 - core index']
  #allocation1 [shape = 'u32[144,128]{1,0:T(1,128)}', space=vmem, size = 0x12000, scoped, tag = 'internal scratch']
  #allocation2 [shape = 'bf16[48,64]{1,0:T(16,128)(2,1)}', space=vmem, size = 0x3000, scoped, tag = 'scratch operand']
  #allocation3 [shape = 'bf16[48,64]{1,0:T(16,128)(2,1)}', space=vmem, size = 0x3000, scoped, tag = 'scratch operand']
  %s0 = inlined_call_operand.vmem [shape: f32[2,512,64], index: 0, kind: input, shape index: {}]
  %s1 = inlined_call_operand.vmem [shape: f32[2,1024,64], index: 1, kind: input, shape index: {}]
  %s2 = inlined_call_operand.vmem [shape: f32[2,64,256], index: 2, kind: input, shape index: {}]
  %s3 = inlined_call_operand.vmem [shape: bf16[48,512], index: 3, kind: input, shape index: {}]
  %s4 = inlined_call_operand.vmem [shape: f32[48,1], index: 4, kind: input, shape index: {}]
  %s5 = inlined_call_operand.vmem [shape: bf16[64,256], index: 5, kind: input, shape index: {}, may-alias: {5,8}]
  %s6 = inlined_call_operand.vmem [shape: bf16[48,1024], index: 6, kind: input, shape index: {}]
  %s7 = inlined_call_operand.vmem [shape: f32[48,1], index: 7, kind: input, shape index: {}]
  %s8 = inlined_call_operand.vmem [shape: bf16[64,256], index: 8, kind: input, shape index: {}, may-alias: {5,8}]
  %s9 = inlined_call_operand.vmem [shape: f32[2,160,256], index: 9, kind: output, shape index: {}]
  %s10 = sld [smem:[#allocation0]]
  $region227: #{feature_fused_forward.1} parent=0
    _
  %s12 = ssub.s32 1, %s10
  %s13 = scalar_select 0, %s12, %s10
  $region1: #{feature_fused_forward.1} parent=0
    #allocation4 [shape = 'u8[65536]{0}', space=vmem, size = 0x10000, scoped, tag = 'input window, operand 2']
    #allocation5 [shape = 'u8[32768]{0}', space=vmem, size = 0x8000, scoped, tag = 'input window, operand 5']
    #allocation6 [shape = 'u8[32768]{0}', space=vmem, size = 0x8000, scoped, tag = 'input window, operand 8']
    #allocation7 [shape = 'u8[163840]{0}', space=vmem, size = 0x28000, scoped, tag = 'output window, operand 0']
    loop: start=0, step=1, limit=6
    $region2: #{feature_fused_forward.1} parent=1 // loop_pre_header
      _
    $region3: #{feature_fused_forward.1} parent=1 // loop_header
      %s15 = sphi 0, %s19
      %p16 = scmp.ge.s32.totalorder %s15, 6
      %s22 = sphi 0, %s34
      %s23 = sphi 0, %s30
      %s24 = sphi 0, %s22
      %s25 = sphi 0, %s23
      %s26 = sphi 0, %s24
      %s27 = sphi 0, %s25
      %s37 = sphi 0, %s39
      %s40 = sphi 0, %s37
      %s41 = sphi 0, %s40
      %s57 = sphi 0, %s41
      %s63 = sphi 0, %s65
      %s66 = sphi 0, %s63
      %s67 = sphi 0, %s66
      %s83 = sphi 0, %s67
      %s91 = sphi 0, %s93
      %s94 = sphi 0, %s91
      %s95 = sphi 0, %s94
      %s111 = sphi 0, %s95
      %s115 = sphi 0, %s115
      %s117 = sphi 0, %s115
      %s118 = sphi 0, %s117
      %s132 = sphi 0, %s118
      %s136 = sphi 0, %s136
      %s138 = sphi 0, %s136
      %s139 = sphi 0, %s138
      %s153 = sphi 0, %s139
      %s159 = sphi 0, %s161
      %s162 = sphi 0, %s159
      %s163 = sphi 0, %s162
      %s179 = sphi 0, %s163
      %s183 = sphi 0, %s183
      %s185 = sphi 0, %s183
      %s186 = sphi 0, %s185
      %s200 = sphi 0, %s186
      %s204 = sphi 0, %s204
      %s206 = sphi 0, %s204
      %s207 = sphi 0, %s206
      %s221 = sphi 0, %s207
      %s227 = sphi 0, %s229
      %s230 = sphi 0, %s227
      %s231 = sphi 0, %s230
      %s247 = sphi 0, %s231
      %s255 = sphi 0, %s257
      %s258 = sphi 0, %s255
      %s259 = sphi 0, %s258
      %s275 = sphi 0, %s259
    $region4: #{feature_fused_forward.1} parent=1 // loop_header_branch
      %18 = sbr.rel (%p16) target = $region8
    $region5: #{feature_fused_forward.1} parent=1 // loop_body
      %s20 = ssub.s32 %s15, 1
      %s21 = ssub.s32 %s15, 2
      %s28 = sadd.s32 1, %s23
      %p29 = scmp.ge.s32.totalorder %s28, 2
      %s30 = scalar_select %p29, 0, %s28
      %s31 = sadd.s32 1, %s22
      %s32 = scalar_select %p29, %s31, %s22
      %p33 = scmp.ge.s32.totalorder %s32, 2
      %s34 = scalar_select %p33, 0, %s32
      %s35 = ssub.s32 %s22, %s34
      %p36 = scmp.eq.s32.totalorder %s35, 0
      %s38 = sadd.s32 %s37, 1
      %s39 = scalar_select %p36, %s37, %s38
      %p42 = pneg %p36
      %p43 = scmp.eq.s32.totalorder %s15, 3
      %p44 = por %p42, %p43
      %p45 = scmp.ne.s32.totalorder %s37, %s40
      %p46 = scmp.eq.s32.totalorder %s15, 0
      %p47 = por %p45, %p46
      %p48 = scmp.ne.s32.totalorder %s37, %s40
      %p49 = scmp.eq.s32.totalorder %s20, 3
      %p50 = por %p48, %p49
      %p51 = scmp.ne.s32.totalorder %s40, %s41
      %p52 = scmp.eq.s32.totalorder %s20, 0
      %p53 = por %p51, %p52
      %p54 = scmp.ne.s32.totalorder %s40, %s41
      %p55 = scmp.eq.s32.totalorder %s21, 3
      %p56 = por %p54, %p55
      %p58 = scmp.ne.s32.totalorder %s41, %s57
      %p59 = scmp.eq.s32.totalorder %s21, 0
      %p60 = por %p58, %p59
      %s61 = ssub.s32 %s22, %s34
      %p62 = scmp.eq.s32.totalorder %s61, 0
      %s64 = sadd.s32 %s63, 1
      %s65 = scalar_select %p62, %s63, %s64
      %p68 = pneg %p62
      %p69 = scmp.eq.s32.totalorder %s15, 3
      %p70 = por %p68, %p69
      %p71 = scmp.ne.s32.totalorder %s63, %s66
      %p72 = scmp.eq.s32.totalorder %s15, 0
      %p73 = por %p71, %p72
      %p74 = scmp.ne.s32.totalorder %s63, %s66
      %p75 = scmp.eq.s32.totalorder %s20, 3
      %p76 = por %p74, %p75
      %p77 = scmp.ne.s32.totalorder %s66, %s67
      %p78 = scmp.eq.s32.totalorder %s20, 0
      %p79 = por %p77, %p78
      %p80 = scmp.ne.s32.totalorder %s66, %s67
      %p81 = scmp.eq.s32.totalorder %s21, 3
      %p82 = por %p80, %p81
      %p84 = scmp.ne.s32.totalorder %s67, %s83
      %p85 = scmp.eq.s32.totalorder %s21, 0
      %p86 = por %p84, %p85
      %s87 = ssub.s32 %s22, %s34
      %s88 = ssub.s32 %s23, %s30
      %s89 = sor.u32 %s87, %s88
      %p90 = scmp.eq.s32.totalorder %s89, 0
      %s92 = sadd.s32 %s91, 1
      %s93 = scalar_select %p90, %s91, %s92
      %p96 = pneg %p90
      %p97 = scmp.eq.s32.totalorder %s15, 3
      %p98 = por %p96, %p97
      %p99 = scmp.ne.s32.totalorder %s91, %s94
      %p100 = scmp.eq.s32.totalorder %s15, 0
      %p101 = por %p99, %p100
      %p102 = scmp.ne.s32.totalorder %s91, %s94
      %p103 = scmp.eq.s32.totalorder %s20, 3
      %p104 = por %p102, %p103
      %p105 = scmp.ne.s32.totalorder %s94, %s95
      %p106 = scmp.eq.s32.totalorder %s20, 0
      %p107 = por %p105, %p106
      %p108 = scmp.ne.s32.totalorder %s94, %s95
      %p109 = scmp.eq.s32.totalorder %s21, 3
      %p110 = por %p108, %p109
      %p112 = scmp.ne.s32.totalorder %s95, %s111
      %p113 = scmp.eq.s32.totalorder %s21, 0
      %p114 = por %p112, %p113
      %s116 = sadd.s32 %s115, 1
      %p119 = scmp.eq.s32.totalorder %s15, 3
      %p120 = scmp.ne.s32.totalorder %s115, %s117
      %p121 = scmp.eq.s32.totalorder %s15, 0
      %p122 = por %p120, %p121
      %p123 = scmp.ne.s32.totalorder %s115, %s117
      %p124 = scmp.eq.s32.totalorder %s20, 3
      %p125 = por %p123, %p124
      %p126 = scmp.ne.s32.totalorder %s117, %s118
      %p127 = scmp.eq.s32.totalorder %s20, 0
      %p128 = por %p126, %p127
      %p129 = scmp.ne.s32.totalorder %s117, %s118
      %p130 = scmp.eq.s32.totalorder %s21, 3
      %p131 = por %p129, %p130
      %p133 = scmp.ne.s32.totalorder %s118, %s132
      %p134 = scmp.eq.s32.totalorder %s21, 0
      %p135 = por %p133, %p134
      %s137 = sadd.s32 %s136, 1
      %p140 = scmp.eq.s32.totalorder %s15, 3
      %p141 = scmp.ne.s32.totalorder %s136, %s138
      %p142 = scmp.eq.s32.totalorder %s15, 0
      %p143 = por %p141, %p142
      %p144 = scmp.ne.s32.totalorder %s136, %s138
      %p145 = scmp.eq.s32.totalorder %s20, 3
      %p146 = por %p144, %p145
      %p147 = scmp.ne.s32.totalorder %s138, %s139
      %p148 = scmp.eq.s32.totalorder %s20, 0
      %p149 = por %p147, %p148
      %p150 = scmp.ne.s32.totalorder %s138, %s139
      %p151 = scmp.eq.s32.totalorder %s21, 3
      %p152 = por %p150, %p151
      %p154 = scmp.ne.s32.totalorder %s139, %s153
      %p155 = scmp.eq.s32.totalorder %s21, 0
      %p156 = por %p154, %p155
      %s157 = ssub.s32 %s23, %s30
      %p158 = scmp.eq.s32.totalorder %s157, 0
      %s160 = sadd.s32 %s159, 1
      %s161 = scalar_select %p158, %s159, %s160
      %p164 = pneg %p158
      %p165 = scmp.eq.s32.totalorder %s15, 3
      %p166 = por %p164, %p165
      %p167 = scmp.ne.s32.totalorder %s159, %s162
      %p168 = scmp.eq.s32.totalorder %s15, 0
      %p169 = por %p167, %p168
      %p170 = scmp.ne.s32.totalorder %s159, %s162
      %p171 = scmp.eq.s32.totalorder %s20, 3
      %p172 = por %p170, %p171
      %p173 = scmp.ne.s32.totalorder %s162, %s163
      %p174 = scmp.eq.s32.totalorder %s20, 0
      %p175 = por %p173, %p174
      %p176 = scmp.ne.s32.totalorder %s162, %s163
      %p177 = scmp.eq.s32.totalorder %s21, 3
      %p178 = por %p176, %p177
      %p180 = scmp.ne.s32.totalorder %s163, %s179
      %p181 = scmp.eq.s32.totalorder %s21, 0
      %p182 = por %p180, %p181
      %s184 = sadd.s32 %s183, 1
      %p187 = scmp.eq.s32.totalorder %s15, 3
      %p188 = scmp.ne.s32.totalorder %s183, %s185
      %p189 = scmp.eq.s32.totalorder %s15, 0
      %p190 = por %p188, %p189
      %p191 = scmp.ne.s32.totalorder %s183, %s185
      %p192 = scmp.eq.s32.totalorder %s20, 3
      %p193 = por %p191, %p192
      %p194 = scmp.ne.s32.totalorder %s185, %s186
      %p195 = scmp.eq.s32.totalorder %s20, 0
      %p196 = por %p194, %p195
      %p197 = scmp.ne.s32.totalorder %s185, %s186
      %p198 = scmp.eq.s32.totalorder %s21, 3
      %p199 = por %p197, %p198
      %p201 = scmp.ne.s32.totalorder %s186, %s200
      %p202 = scmp.eq.s32.totalorder %s21, 0
      %p203 = por %p201, %p202
      %s205 = sadd.s32 %s204, 1
      %p208 = scmp.eq.s32.totalorder %s15, 3
      %p209 = scmp.ne.s32.totalorder %s204, %s206
      %p210 = scmp.eq.s32.totalorder %s15, 0
      %p211 = por %p209, %p210
      %p212 = scmp.ne.s32.totalorder %s204, %s206
      %p213 = scmp.eq.s32.totalorder %s20, 3
      %p214 = por %p212, %p213
      %p215 = scmp.ne.s32.totalorder %s206, %s207
      %p216 = scmp.eq.s32.totalorder %s20, 0
      %p217 = por %p215, %p216
      %p218 = scmp.ne.s32.totalorder %s206, %s207
      %p219 = scmp.eq.s32.totalorder %s21, 3
      %p220 = por %p218, %p219
      %p222 = scmp.ne.s32.totalorder %s207, %s221
      %p223 = scmp.eq.s32.totalorder %s21, 0
      %p224 = por %p222, %p223
      %s225 = ssub.s32 %s23, %s30
      %p226 = scmp.eq.s32.totalorder %s225, 0
      %s228 = sadd.s32 %s227, 1
      %s229 = scalar_select %p226, %s227, %s228
      %p232 = pneg %p226
      %p233 = scmp.eq.s32.totalorder %s15, 3
      %p234 = por %p232, %p233
      %p235 = scmp.ne.s32.totalorder %s227, %s230
      %p236 = scmp.eq.s32.totalorder %s15, 0
      %p237 = por %p235, %p236
      %p238 = scmp.ne.s32.totalorder %s227, %s230
      %p239 = scmp.eq.s32.totalorder %s20, 3
      %p240 = por %p238, %p239
      %p241 = scmp.ne.s32.totalorder %s230, %s231
      %p242 = scmp.eq.s32.totalorder %s20, 0
      %p243 = por %p241, %p242
      %p244 = scmp.ne.s32.totalorder %s230, %s231
      %p245 = scmp.eq.s32.totalorder %s21, 3
      %p246 = por %p244, %p245
      %p248 = scmp.ne.s32.totalorder %s231, %s247
      %p249 = scmp.eq.s32.totalorder %s21, 0
      %p250 = por %p248, %p249
      %s251 = ssub.s32 %s22, %s34
      %s252 = ssub.s32 %s23, %s30
      %s253 = sor.u32 %s251, %s252
      %p254 = scmp.eq.s32.totalorder %s253, 0
      %s256 = sadd.s32 %s255, 1
      %s257 = scalar_select %p254, %s255, %s256
      %p260 = pneg %p254
      %p261 = scmp.eq.s32.totalorder %s15, 3
      %p262 = por %p260, %p261
      %p263 = scmp.ne.s32.totalorder %s255, %s258
      %p264 = scmp.eq.s32.totalorder %s15, 0
      %p265 = por %p263, %p264
      %p266 = scmp.ne.s32.totalorder %s255, %s258
      %p267 = scmp.eq.s32.totalorder %s20, 3
      %p268 = por %p266, %p267
      %p269 = scmp.ne.s32.totalorder %s258, %s259
      %p270 = scmp.eq.s32.totalorder %s20, 0
      %p271 = por %p269, %p270
      %p272 = scmp.ne.s32.totalorder %s258, %s259
      %p273 = scmp.eq.s32.totalorder %s21, 3
      %p274 = por %p272, %p273
      %p276 = scmp.ne.s32.totalorder %s259, %s275
      %p277 = scmp.eq.s32.totalorder %s21, 0
      %p278 = por %p276, %p277
      %p279 = scmp.le.s32.totalorder 1, %s15
      %p280 = scmp.lt.s32.totalorder %s15, 5
      %p281 = pnand %p279, %p280
      %p282 = pneg %p281
      // Predicated region
      $region9: #{feature_fused_forward.1} parent=5 // pred_check
        _
      $region10: #{feature_fused_forward.1} parent=5 // pred_check_branch
        %284 = sbr.rel (%p281) target = $region12
      $region11: #{feature_fused_forward.1} parent=5 // pred_region
        %s285 = ssub.s32 %s15, 1
        // Predicated region
        $region13: #{feature_fused_forward.1} parent=11 // pred_check
          %p286 = pneg %p128
        $region14: #{feature_fused_forward.1} parent=11 // pred_check_branch
          %288 = sbr.rel (%p286) target = $region16
        $region15: #{feature_fused_forward.1} parent=11 // pred_region
          _
        $region16: #{feature_fused_forward.1} parent=11 // pred_fallthru
          _
        // Predicated region
        $region17: #{feature_fused_forward.1} parent=11 // pred_check
          %p289 = pneg %p149
        $region18: #{feature_fused_forward.1} parent=11 // pred_check_branch
          %291 = sbr.rel (%p289) target = $region20
        $region19: #{feature_fused_forward.1} parent=11 // pred_region
          _
        $region20: #{feature_fused_forward.1} parent=11 // pred_fallthru
          _
        // Predicated region
        $region21: #{feature_fused_forward.1} parent=11 // pred_check
          %p292 = pneg %p196
        $region22: #{feature_fused_forward.1} parent=11 // pred_check_branch
          %294 = sbr.rel (%p292) target = $region24
        $region23: #{feature_fused_forward.1} parent=11 // pred_region
          _
        $region24: #{feature_fused_forward.1} parent=11 // pred_fallthru
          _
        // Predicated region
        $region25: #{feature_fused_forward.1} parent=11 // pred_check
          %p295 = pneg %p217
        $region26: #{feature_fused_forward.1} parent=11 // pred_check_branch
          %297 = sbr.rel (%p295) target = $region28
        $region27: #{feature_fused_forward.1} parent=11 // pred_region
          _
        $region28: #{feature_fused_forward.1} parent=11 // pred_fallthru
          _
      $region12: #{feature_fused_forward.1} parent=5 // pred_fallthru
        _
      %p298 = scmp.lt.s32.totalorder %s15, 4
      // Predicated region
      $region29: #{feature_fused_forward.1} parent=5 // pred_check
        %p299 = pneg %p298
      $region30: #{feature_fused_forward.1} parent=5 // pred_check_branch
        %301 = sbr.rel (%p299) target = $region32
      $region31: #{feature_fused_forward.1} parent=5 // pred_region
        // Predicated region
        $region33: #{feature_fused_forward.1} parent=31 // pred_check
          %p302 = pneg %p47
        $region34: #{feature_fused_forward.1} parent=31 // pred_check_branch
          %304 = sbr.rel (%p302) target = $region36
        $region35: #{feature_fused_forward.1} parent=31 // pred_region
          %p305 = scmp.lt.s32.totalorder %s22, 1
          %s306 = scalar_select %p305, %s22, 1
          %s307 = smul.addr %s306, 64
          %s308 = smul.addr %s307, 8
          %s309 = scalar_lea.vmem %s0, %s308
        $region36: #{feature_fused_forward.1} parent=31 // pred_fallthru
          _
        // Predicated region
        $region37: #{feature_fused_forward.1} parent=31 // pred_check
          %p310 = pneg %p73
        $region38: #{feature_fused_forward.1} parent=31 // pred_check_branch
          %312 = sbr.rel (%p310) target = $region40
        $region39: #{feature_fused_forward.1} parent=31 // pred_region
          %p313 = scmp.lt.s32.totalorder %s22, 1
          %s314 = scalar_select %p313, %s22, 1
          %s315 = smul.addr %s314, 128
          %s316 = smul.addr %s315, 8
          %s317 = scalar_lea.vmem %s1, %s316
        $region40: #{feature_fused_forward.1} parent=31 // pred_fallthru
          _
        // Predicated region
        $region41: #{feature_fused_forward.1} parent=31 // pred_check
          %p318 = pneg %p101
        $region42: #{feature_fused_forward.1} parent=31 // pred_check_branch
          %320 = sbr.rel (%p318) target = $region44
        $region43: #{feature_fused_forward.1} parent=31 // pred_region
          %s321 = sand.u32 %s91, 1
          %s322 = sand.u32 %s91, 1
          %s323 = smul.addr %s322, 64
          %s324 = scalar_lea.vmem [#allocation4], %s323
          %s325 = smul.addr %s22, 16
          %s326 = sadd.s32 %s23, %s325
          %s327 = smul.addr %s326, 8
          %s328 = scalar_lea.vmem %s2, %s327
          // Predicated region
          $region45: #{feature_fused_forward.1} parent=43 // pred_check
            _
          $region46: #{feature_fused_forward.1} parent=43 // pred_check_branch
            %330 = sbr.rel (0) target = $region48
          $region47: #{feature_fused_forward.1} parent=43 // pred_region
            // Predicated region
            $region49: #{feature_fused_forward.1} parent=47 // pred_check
              _
            $region50: #{feature_fused_forward.1} parent=47 // pred_check_branch
              %332 = sbr.rel (0) target = $region52
            $region51: #{feature_fused_forward.1} parent=47 // pred_region
              // Predicated region
              $region64: #{feature_fused_forward.1} parent=51 // pred_check
                _
              $region65: #{feature_fused_forward.1} parent=51 // pred_check_branch
                %361 = sbr.rel (0) target = $region67
              $region66: #{feature_fused_forward.1} parent=51 // pred_region
                loop: start=0, step=1, limit=1
                $region68: #{feature_fused_forward.1} parent=66 // loop_pre_header
                  _
                $region69: #{feature_fused_forward.1} parent=66 // loop_header
                  %s363 = sphi 0, %s367
                  %p364 = scmp.ge.s32.totalorder %s363, 1
                  %s368 = sphi %s328, %s328
                  %s369 = sphi %s324, %s324
                $region70: #{feature_fused_forward.1} parent=66 // loop_header_branch
                  %366 = sbr.rel (%p364) target = $region74
                $region71: #{feature_fused_forward.1} parent=66 // loop_body
                  %v370 = vld [vmem:[%s368] sm:$0xff]
                  %371 = vst [vmem:[%s369] sm:$0xff] %v370
                  %v372 = vld [vmem:[%s368 + $0x10] sm:$0xff]
                  %373 = vst [vmem:[%s369 + $0x8] sm:$0xff] %v372
                  %v374 = vld [vmem:[%s368 + $0x20] sm:$0xff]
                  %375 = vst [vmem:[%s369 + $0x10] sm:$0xff] %v374
                  %v376 = vld [vmem:[%s368 + $0x30] sm:$0xff]
                  %377 = vst [vmem:[%s369 + $0x18] sm:$0xff] %v376
                  %v378 = vld [vmem:[%s368 + $0x40] sm:$0xff]
                  %379 = vst [vmem:[%s369 + $0x20] sm:$0xff] %v378
                  %v380 = vld [vmem:[%s368 + $0x50] sm:$0xff]
                  %381 = vst [vmem:[%s369 + $0x28] sm:$0xff] %v380
                  %v382 = vld [vmem:[%s368 + $0x60] sm:$0xff]
                  %383 = vst [vmem:[%s369 + $0x30] sm:$0xff] %v382
                  %v384 = vld [vmem:[%s368 + $0x70] sm:$0xff]
                  %385 = vst [vmem:[%s369 + $0x38] sm:$0xff] %v384
                $region72: #{feature_fused_forward.1} parent=66 // loop_footer
                  %s367 = sadd.s32 1, %s363
                $region73: #{feature_fused_forward.1} parent=66 // loop_footer_branch
                  %362 = sbr.rel target = $region69
                $region74: #{feature_fused_forward.1} parent=66 // loop_exit
                  _
              $region67: #{feature_fused_forward.1} parent=51 // pred_fallthru
                _
              // Predicated region
              $region75: #{feature_fused_forward.1} parent=51 // pred_check
                _
              $region76: #{feature_fused_forward.1} parent=51 // pred_check_branch
                %387 = sbr.rel target = $region78
              $region77: #{feature_fused_forward.1} parent=51 // pred_region
                _
              $region78: #{feature_fused_forward.1} parent=51 // pred_fallthru
                _
            $region52: #{feature_fused_forward.1} parent=47 // pred_fallthru
              _
            // Predicated region
            $region53: #{feature_fused_forward.1} parent=47 // pred_check
              _
            $region54: #{feature_fused_forward.1} parent=47 // pred_check_branch
              %334 = sbr.rel target = $region56
            $region55: #{feature_fused_forward.1} parent=47 // pred_region
              loop: start=0, step=1, limit=1
              $region57: #{feature_fused_forward.1} parent=55 // loop_pre_header
                _
              $region58: #{feature_fused_forward.1} parent=55 // loop_header
                %s337 = sphi 0, %s341
                %p338 = scmp.ge.s32.totalorder %s337, 1
                %s342 = sphi %s328, %s328
                %s343 = sphi %s324, %s324
              $region59: #{feature_fused_forward.1} parent=55 // loop_header_branch
                %340 = sbr.rel (%p338) target = $region63
              $region60: #{feature_fused_forward.1} parent=55 // loop_body
                %v344 = vld [vmem:[%s342] sm:$0xff]
                %345 = vst [vmem:[%s343] sm:$0xff] %v344
                %v346 = vld [vmem:[%s342 + $0x10] sm:$0xff]
                %347 = vst [vmem:[%s343 + $0x8] sm:$0xff] %v346
                %v348 = vld [vmem:[%s342 + $0x20] sm:$0xff]
                %349 = vst [vmem:[%s343 + $0x10] sm:$0xff] %v348
                %v350 = vld [vmem:[%s342 + $0x30] sm:$0xff]
                %351 = vst [vmem:[%s343 + $0x18] sm:$0xff] %v350
                %v352 = vld [vmem:[%s342 + $0x40] sm:$0xff]
                %353 = vst [vmem:[%s343 + $0x20] sm:$0xff] %v352
                %v354 = vld [vmem:[%s342 + $0x50] sm:$0xff]
                %355 = vst [vmem:[%s343 + $0x28] sm:$0xff] %v354
                %v356 = vld [vmem:[%s342 + $0x60] sm:$0xff]
                %357 = vst [vmem:[%s343 + $0x30] sm:$0xff] %v356
                %v358 = vld [vmem:[%s342 + $0x70] sm:$0xff]
                %359 = vst [vmem:[%s343 + $0x38] sm:$0xff] %v358
              $region61: #{feature_fused_forward.1} parent=55 // loop_footer
                %s341 = sadd.s32 1, %s337
              $region62: #{feature_fused_forward.1} parent=55 // loop_footer_branch
                %336 = sbr.rel target = $region58
              $region63: #{feature_fused_forward.1} parent=55 // loop_exit
                _
            $region56: #{feature_fused_forward.1} parent=47 // pred_fallthru
              _
          $region48: #{feature_fused_forward.1} parent=43 // pred_fallthru
            _
          %388 = vnop
        $region44: #{feature_fused_forward.1} parent=31 // pred_fallthru
          _
        // Predicated region
        $region79: #{feature_fused_forward.1} parent=31 // pred_check
          %p389 = pneg %p169
        $region80: #{feature_fused_forward.1} parent=31 // pred_check_branch
          %391 = sbr.rel (%p389) target = $region82
        $region81: #{feature_fused_forward.1} parent=31 // pred_region
          %s392 = sand.u32 %s159, 1
          %s393 = sand.u32 %s159, 1
          %s394 = smul.addr %s393, 32
          %s395 = scalar_lea.vmem [#allocation5], %s394
          %s396 = smul.addr %s23, 4
          %s397 = scalar_lea.vmem %s5, %s396
          // Predicated region
          $region83: #{feature_fused_forward.1} parent=81 // pred_check
            _
          $region84: #{feature_fused_forward.1} parent=81 // pred_check_branch
            %399 = sbr.rel (0) target = $region86
          $region85: #{feature_fused_forward.1} parent=81 // pred_region
            // Predicated region
            $region87: #{feature_fused_forward.1} parent=85 // pred_check
              _
            $region88: #{feature_fused_forward.1} parent=85 // pred_check_branch
              %401 = sbr.rel target = $region90
            $region89: #{feature_fused_forward.1} parent=85 // pred_region
              // Predicated region
              $region102: #{feature_fused_forward.1} parent=89 // pred_check
                _
              $region103: #{feature_fused_forward.1} parent=89 // pred_check_branch
                %430 = sbr.rel (0) target = $region105
              $region104: #{feature_fused_forward.1} parent=89 // pred_region
                loop: start=0, step=1, limit=1
                $region106: #{feature_fused_forward.1} parent=104 // loop_pre_header
                  _
                $region107: #{feature_fused_forward.1} parent=104 // loop_header
                  %s432 = sphi 0, %s436
                  %p433 = scmp.ge.s32.totalorder %s432, 1
                  %s437 = sphi %s397, %s397
                  %s438 = sphi %s395, %s395
                $region108: #{feature_fused_forward.1} parent=104 // loop_header_branch
                  %435 = sbr.rel (%p433) target = $region112
                $region109: #{feature_fused_forward.1} parent=104 // loop_body
                  _
                $region110: #{feature_fused_forward.1} parent=104 // loop_footer
                  %s436 = sadd.s32 1, %s432
                $region111: #{feature_fused_forward.1} parent=104 // loop_footer_branch
                  %431 = sbr.rel target = $region107
                $region112: #{feature_fused_forward.1} parent=104 // loop_exit
                  _
                loop: start=0, step=1, limit=1
                $region113: #{feature_fused_forward.1} parent=104 // loop_pre_header
                  _
                $region114: #{feature_fused_forward.1} parent=104 // loop_header
                  %s441 = sphi 0, %s445
                  %p442 = scmp.ge.s32.totalorder %s441, 1
                  %s446 = sphi %s397, %s397
                  %s447 = sphi %s395, %s395
                $region115: #{feature_fused_forward.1} parent=104 // loop_header_branch
                  %444 = sbr.rel (%p442) target = $region119
                $region116: #{feature_fused_forward.1} parent=104 // loop_body
                  %v448 = vld [vmem:[%s446] sm:$0xf]
                  %449 = vst [vmem:[%s447] sm:$0xf] %v448
                  %v450 = vld [vmem:[%s446 + $0x8] sm:$0xf]
                  %451 = vst [vmem:[%s447 + $0x4] sm:$0xf] %v450
                  %v452 = vld [vmem:[%s446 + $0x10] sm:$0xf]
                  %453 = vst [vmem:[%s447 + $0x8] sm:$0xf] %v452
                  %v454 = vld [vmem:[%s446 + $0x18] sm:$0xf]
                  %455 = vst [vmem:[%s447 + $0xc] sm:$0xf] %v454
                  %v456 = vld [vmem:[%s446 + $0x20] sm:$0xf]
                  %457 = vst [vmem:[%s447 + $0x10] sm:$0xf] %v456
                  %v458 = vld [vmem:[%s446 + $0x28] sm:$0xf]
                  %459 = vst [vmem:[%s447 + $0x14] sm:$0xf] %v458
                  %v460 = vld [vmem:[%s446 + $0x30] sm:$0xf]
                  %461 = vst [vmem:[%s447 + $0x18] sm:$0xf] %v460
                  %v462 = vld [vmem:[%s446 + $0x38] sm:$0xf]
                  %463 = vst [vmem:[%s447 + $0x1c] sm:$0xf] %v462
                $region117: #{feature_fused_forward.1} parent=104 // loop_footer
                  %s445 = sadd.s32 1, %s441
                $region118: #{feature_fused_forward.1} parent=104 // loop_footer_branch
                  %440 = sbr.rel target = $region114
                $region119: #{feature_fused_forward.1} parent=104 // loop_exit
                  _
              $region105: #{feature_fused_forward.1} parent=89 // pred_fallthru
                _
            $region90: #{feature_fused_forward.1} parent=85 // pred_fallthru
              _
            // Predicated region
            $region91: #{feature_fused_forward.1} parent=85 // pred_check
              _
            $region92: #{feature_fused_forward.1} parent=85 // pred_check_branch
              %403 = sbr.rel (0) target = $region94
            $region93: #{feature_fused_forward.1} parent=85 // pred_region
              loop: start=0, step=1, limit=1
              $region95: #{feature_fused_forward.1} parent=93 // loop_pre_header
                _
              $region96: #{feature_fused_forward.1} parent=93 // loop_header
                %s406 = sphi 0, %s410
                %p407 = scmp.ge.s32.totalorder %s406, 1
                %s411 = sphi %s397, %s397
                %s412 = sphi %s395, %s395
              $region97: #{feature_fused_forward.1} parent=93 // loop_header_branch
                %409 = sbr.rel (%p407) target = $region101
              $region98: #{feature_fused_forward.1} parent=93 // loop_body
                %v413 = vld [vmem:[%s411] sm:$0xf]
                %414 = vst [vmem:[%s412] sm:$0xf] %v413
                %v415 = vld [vmem:[%s411 + $0x8] sm:$0xf]
                %416 = vst [vmem:[%s412 + $0x4] sm:$0xf] %v415
                %v417 = vld [vmem:[%s411 + $0x10] sm:$0xf]
                %418 = vst [vmem:[%s412 + $0x8] sm:$0xf] %v417
                %v419 = vld [vmem:[%s411 + $0x18] sm:$0xf]
                %420 = vst [vmem:[%s412 + $0xc] sm:$0xf] %v419
                %v421 = vld [vmem:[%s411 + $0x20] sm:$0xf]
                %422 = vst [vmem:[%s412 + $0x10] sm:$0xf] %v421
                %v423 = vld [vmem:[%s411 + $0x28] sm:$0xf]
                %424 = vst [vmem:[%s412 + $0x14] sm:$0xf] %v423
                %v425 = vld [vmem:[%s411 + $0x30] sm:$0xf]
                %426 = vst [vmem:[%s412 + $0x18] sm:$0xf] %v425
                %v427 = vld [vmem:[%s411 + $0x38] sm:$0xf]
                %428 = vst [vmem:[%s412 + $0x1c] sm:$0xf] %v427
              $region99: #{feature_fused_forward.1} parent=93 // loop_footer
                %s410 = sadd.s32 1, %s406
              $region100: #{feature_fused_forward.1} parent=93 // loop_footer_branch
                %405 = sbr.rel target = $region96
              $region101: #{feature_fused_forward.1} parent=93 // loop_exit
                _
            $region94: #{feature_fused_forward.1} parent=85 // pred_fallthru
              _
          $region86: #{feature_fused_forward.1} parent=81 // pred_fallthru
            _
          %464 = vnop
        $region82: #{feature_fused_forward.1} parent=31 // pred_fallthru
          _
        // Predicated region
        $region120: #{feature_fused_forward.1} parent=31 // pred_check
          %p465 = pneg %p237
        $region121: #{feature_fused_forward.1} parent=31 // pred_check_branch
          %467 = sbr.rel (%p465) target = $region123
        $region122: #{feature_fused_forward.1} parent=31 // pred_region
          %s468 = sand.u32 %s227, 1
          %s469 = sand.u32 %s227, 1
          %s470 = smul.addr %s469, 32
          %s471 = scalar_lea.vmem [#allocation6], %s470
          %s472 = smul.addr %s23, 4
          %s473 = scalar_lea.vmem %s8, %s472
          // Predicated region
          $region124: #{feature_fused_forward.1} parent=122 // pred_check
            _
          $region125: #{feature_fused_forward.1} parent=122 // pred_check_branch
            %475 = sbr.rel (0) target = $region127
          $region126: #{feature_fused_forward.1} parent=122 // pred_region
            // Predicated region
            $region128: #{feature_fused_forward.1} parent=126 // pred_check
              _
            $region129: #{feature_fused_forward.1} parent=126 // pred_check_branch
              %477 = sbr.rel target = $region131
            $region130: #{feature_fused_forward.1} parent=126 // pred_region
              // Predicated region
              $region143: #{feature_fused_forward.1} parent=130 // pred_check
                _
              $region144: #{feature_fused_forward.1} parent=130 // pred_check_branch
                %506 = sbr.rel (0) target = $region146
              $region145: #{feature_fused_forward.1} parent=130 // pred_region
                loop: start=0, step=1, limit=1
                $region147: #{feature_fused_forward.1} parent=145 // loop_pre_header
                  _
                $region148: #{feature_fused_forward.1} parent=145 // loop_header
                  %s508 = sphi 0, %s512
                  %p509 = scmp.ge.s32.totalorder %s508, 1
                  %s513 = sphi %s473, %s473
                  %s514 = sphi %s471, %s471
                $region149: #{feature_fused_forward.1} parent=145 // loop_header_branch
                  %511 = sbr.rel (%p509) target = $region153
                $region150: #{feature_fused_forward.1} parent=145 // loop_body
                  _
                $region151: #{feature_fused_forward.1} parent=145 // loop_footer
                  %s512 = sadd.s32 1, %s508
                $region152: #{feature_fused_forward.1} parent=145 // loop_footer_branch
                  %507 = sbr.rel target = $region148
                $region153: #{feature_fused_forward.1} parent=145 // loop_exit
                  _
                loop: start=0, step=1, limit=1
                $region154: #{feature_fused_forward.1} parent=145 // loop_pre_header
                  _
                $region155: #{feature_fused_forward.1} parent=145 // loop_header
                  %s517 = sphi 0, %s521
                  %p518 = scmp.ge.s32.totalorder %s517, 1
                  %s522 = sphi %s473, %s473
                  %s523 = sphi %s471, %s471
                $region156: #{feature_fused_forward.1} parent=145 // loop_header_branch
                  %520 = sbr.rel (%p518) target = $region160
                $region157: #{feature_fused_forward.1} parent=145 // loop_body
                  %v524 = vld [vmem:[%s522] sm:$0xf]
                  %525 = vst [vmem:[%s523] sm:$0xf] %v524
                  %v526 = vld [vmem:[%s522 + $0x8] sm:$0xf]
                  %527 = vst [vmem:[%s523 + $0x4] sm:$0xf] %v526
                  %v528 = vld [vmem:[%s522 + $0x10] sm:$0xf]
                  %529 = vst [vmem:[%s523 + $0x8] sm:$0xf] %v528
                  %v530 = vld [vmem:[%s522 + $0x18] sm:$0xf]
                  %531 = vst [vmem:[%s523 + $0xc] sm:$0xf] %v530
                  %v532 = vld [vmem:[%s522 + $0x20] sm:$0xf]
                  %533 = vst [vmem:[%s523 + $0x10] sm:$0xf] %v532
                  %v534 = vld [vmem:[%s522 + $0x28] sm:$0xf]
                  %535 = vst [vmem:[%s523 + $0x14] sm:$0xf] %v534
                  %v536 = vld [vmem:[%s522 + $0x30] sm:$0xf]
                  %537 = vst [vmem:[%s523 + $0x18] sm:$0xf] %v536
                  %v538 = vld [vmem:[%s522 + $0x38] sm:$0xf]
                  %539 = vst [vmem:[%s523 + $0x1c] sm:$0xf] %v538
                $region158: #{feature_fused_forward.1} parent=145 // loop_footer
                  %s521 = sadd.s32 1, %s517
                $region159: #{feature_fused_forward.1} parent=145 // loop_footer_branch
                  %516 = sbr.rel target = $region155
                $region160: #{feature_fused_forward.1} parent=145 // loop_exit
                  _
              $region146: #{feature_fused_forward.1} parent=130 // pred_fallthru
                _
            $region131: #{feature_fused_forward.1} parent=126 // pred_fallthru
              _
            // Predicated region
            $region132: #{feature_fused_forward.1} parent=126 // pred_check
              _
            $region133: #{feature_fused_forward.1} parent=126 // pred_check_branch
              %479 = sbr.rel (0) target = $region135
            $region134: #{feature_fused_forward.1} parent=126 // pred_region
              loop: start=0, step=1, limit=1
              $region136: #{feature_fused_forward.1} parent=134 // loop_pre_header
                _
              $region137: #{feature_fused_forward.1} parent=134 // loop_header
                %s482 = sphi 0, %s486
                %p483 = scmp.ge.s32.totalorder %s482, 1
                %s487 = sphi %s473, %s473
                %s488 = sphi %s471, %s471
              $region138: #{feature_fused_forward.1} parent=134 // loop_header_branch
                %485 = sbr.rel (%p483) target = $region142
              $region139: #{feature_fused_forward.1} parent=134 // loop_body
                %v489 = vld [vmem:[%s487] sm:$0xf]
                %490 = vst [vmem:[%s488] sm:$0xf] %v489
                %v491 = vld [vmem:[%s487 + $0x8] sm:$0xf]
                %492 = vst [vmem:[%s488 + $0x4] sm:$0xf] %v491
                %v493 = vld [vmem:[%s487 + $0x10] sm:$0xf]
                %494 = vst [vmem:[%s488 + $0x8] sm:$0xf] %v493
                %v495 = vld [vmem:[%s487 + $0x18] sm:$0xf]
                %496 = vst [vmem:[%s488 + $0xc] sm:$0xf] %v495
                %v497 = vld [vmem:[%s487 + $0x20] sm:$0xf]
                %498 = vst [vmem:[%s488 + $0x10] sm:$0xf] %v497
                %v499 = vld [vmem:[%s487 + $0x28] sm:$0xf]
                %500 = vst [vmem:[%s488 + $0x14] sm:$0xf] %v499
                %v501 = vld [vmem:[%s487 + $0x30] sm:$0xf]
                %502 = vst [vmem:[%s488 + $0x18] sm:$0xf] %v501
                %v503 = vld [vmem:[%s487 + $0x38] sm:$0xf]
                %504 = vst [vmem:[%s488 + $0x1c] sm:$0xf] %v503
              $region140: #{feature_fused_forward.1} parent=134 // loop_footer
                %s486 = sadd.s32 1, %s482
              $region141: #{feature_fused_forward.1} parent=134 // loop_footer_branch
                %481 = sbr.rel target = $region137
              $region142: #{feature_fused_forward.1} parent=134 // loop_exit
                _
            $region135: #{feature_fused_forward.1} parent=126 // pred_fallthru
              _
          $region127: #{feature_fused_forward.1} parent=122 // pred_fallthru
            _
          %540 = vnop
        $region123: #{feature_fused_forward.1} parent=31 // pred_fallthru
          _
      $region32: #{feature_fused_forward.1} parent=5 // pred_fallthru
        _
      %p541 = scmp.le.s32.totalorder 1, %s15
      %p542 = scmp.lt.s32.totalorder %s15, 5
      %p543 = pnand %p541, %p542
      %p544 = pneg %p543
      // Predicated region
      $region161: #{feature_fused_forward.1} parent=5 // pred_check
        _
      $region162: #{feature_fused_forward.1} parent=5 // pred_check_branch
        %546 = sbr.rel (%p543) target = $region164
      $region163: #{feature_fused_forward.1} parent=5 // pred_region
        %s547 = ssub.s32 %s15, 1
        %s548 = sand.u32 %s94, 1
        %s549 = sand.u32 %s94, 1
        %s550 = smul.addr %s549, 64
        %s551 = scalar_lea.vmem [#allocation4], %s550
        // Predicated region
        $region165: #{feature_fused_forward.1} parent=163 // pred_check
          %p552 = pneg %p107
        $region166: #{feature_fused_forward.1} parent=163 // pred_check_branch
          %554 = sbr.rel (%p552) target = $region168
        $region167: #{feature_fused_forward.1} parent=163 // pred_region
          _
        $region168: #{feature_fused_forward.1} parent=163 // pred_fallthru
          _
        %s555 = sand.u32 %s162, 1
        %s556 = sand.u32 %s162, 1
        %s557 = smul.addr %s556, 32
        %s558 = scalar_lea.vmem [#allocation5], %s557
        // Predicated region
        $region169: #{feature_fused_forward.1} parent=163 // pred_check
          %p559 = pneg %p175
        $region170: #{feature_fused_forward.1} parent=163 // pred_check_branch
          %561 = sbr.rel (%p559) target = $region172
        $region171: #{feature_fused_forward.1} parent=163 // pred_region
          _
        $region172: #{feature_fused_forward.1} parent=163 // pred_fallthru
          _
        %s562 = sand.u32 %s230, 1
        %s563 = sand.u32 %s230, 1
        %s564 = smul.addr %s563, 32
        %s565 = scalar_lea.vmem [#allocation6], %s564
        // Predicated region
        $region173: #{feature_fused_forward.1} parent=163 // pred_check
          %p566 = pneg %p243
        $region174: #{feature_fused_forward.1} parent=163 // pred_check_branch
          %568 = sbr.rel (%p566) target = $region176
        $region175: #{feature_fused_forward.1} parent=163 // pred_region
          _
        $region176: #{feature_fused_forward.1} parent=163 // pred_fallthru
          _
        %p569 = scmp.lt.s32.totalorder %s24, 1
        %s570 = scalar_select %p569, %s24, 1
        %s571 = smul.addr %s570, 64
        %s572 = smul.addr %s571, 8
        %s573 = scalar_lea.vmem %s0, %s572
        %p574 = pneg %p53
        %p575 = pneg %p50
        %p576 = scmp.lt.s32.totalorder %s24, 1
        %s577 = scalar_select %p576, %s24, 1
        %s578 = smul.addr %s577, 128
        %s579 = smul.addr %s578, 8
        %s580 = scalar_lea.vmem %s1, %s579
        %p581 = pneg %p79
        %p582 = pneg %p76
        %s583 = sand.u32 %s94, 1
        %s584 = sand.u32 %s94, 1
        %s585 = smul.addr %s584, 64
        %s586 = scalar_lea.vmem [#allocation4], %s585
        %p587 = pneg %p107
        %p588 = pneg %p104
        %p589 = pneg %p128
        %p590 = pneg %p125
        %p591 = pneg %p149
        %p592 = pneg %p146
        %s593 = sand.u32 %s162, 1
        %s594 = sand.u32 %s162, 1
        %s595 = smul.addr %s594, 32
        %s596 = scalar_lea.vmem [#allocation5], %s595
        %p597 = pneg %p175
        %p598 = pneg %p172
        %p599 = pneg %p196
        %p600 = pneg %p193
        %p601 = pneg %p217
        %p602 = pneg %p214
        %s603 = sand.u32 %s230, 1
        %s604 = sand.u32 %s230, 1
        %s605 = smul.addr %s604, 32
        %s606 = scalar_lea.vmem [#allocation6], %s605
        %p607 = pneg %p243
        %p608 = pneg %p240
        %p609 = pneg %p271
        %p610 = pneg %p268
        %s611 = sand.u32 %s258, 1
        %s612 = sand.u32 %s258, 1
        %s613 = smul.addr %s612, 160
        %s614 = scalar_lea.vmem [#allocation7], %s613
        %p615 = scmp.lt.s32.totalorder %s24, 1
        %s616 = scalar_select %p615, %s24, 1
        %s617 = smul.addr %s616, 64
        %s618 = smul.addr %s617, 8
        %s619 = scalar_lea.vmem %s0, %s618
        %p620 = scmp.lt.s32.totalorder %s24, 1
        %s621 = scalar_select %p620, %s24, 1
        %s622 = smul.addr %s621, 128
        %s623 = smul.addr %s622, 8
        %s624 = scalar_lea.vmem %s1, %s623
        %p626 = scmp.eq.s32.totalorder %s25, 0
        // Predicated region
        $region177: #{feature_fused_forward.1} parent=163 // pred_check
          %p627 = pneg %p626
        $region178: #{feature_fused_forward.1} parent=163 // pred_check_branch
          %629 = sbr.rel (%p627) target = $region180
        $region179: #{feature_fused_forward.1} parent=163 // pred_region
          %v630 = vld [vmem:[%s3] sm:$0xff]
          %v631 = vld [vmem:[%s3 + $0x8] sm:$0xff]
          %v632 = vld [vmem:[%s3 + $0x10] sm:$0xff]
          %v633 = vld [vmem:[%s3 + $0x18] sm:$0xff]
          %v634 = vld [vmem:[%s3 + $0x20] sm:$0xff]
          %v635 = vld [vmem:[%s3 + $0x28] sm:$0xff]
          %v636 = vld [vmem:[%s3 + $0x30] sm:$0xff]
          %v637 = vld [vmem:[%s3 + $0x38] sm:$0xff]
          %v638 = vld [vmem:[%s3 + $0x40] sm:$0xff]
          %v639 = vld [vmem:[%s3 + $0x48] sm:$0xff]
          %v640 = vld [vmem:[%s3 + $0x50] sm:$0xff]
          %v641 = vld [vmem:[%s3 + $0x58] sm:$0xff]
          %v642 = vld [vmem:[%s619] sm:$0xff]
          %v643 = vld [vmem:[%s619 + $0x8] sm:$0xff]
          %v644 = vld [vmem:[%s619 + $0x10] sm:$0xff]
          %v645 = vld [vmem:[%s619 + $0x18] sm:$0xff]
          %v646 = vld [vmem:[%s619 + $0x20] sm:$0xff]
          %v647 = vld [vmem:[%s619 + $0x28] sm:$0xff]
          %v648 = vld [vmem:[%s619 + $0x30] sm:$0xff]
          %v649 = vld [vmem:[%s619 + $0x38] sm:$0xff]
          %v650 = vld [vmem:[%s619 + $0x40] sm:$0xff]
          %v651 = vld [vmem:[%s619 + $0x48] sm:$0xff]
          %v652 = vld [vmem:[%s619 + $0x50] sm:$0xff]
          %v653 = vld [vmem:[%s619 + $0x58] sm:$0xff]
          %v654 = vld [vmem:[%s619 + $0x60] sm:$0xff]
          %v655 = vld [vmem:[%s619 + $0x68] sm:$0xff]
          %v656 = vld [vmem:[%s619 + $0x70] sm:$0xff]
          %v657 = vld [vmem:[%s619 + $0x78] sm:$0xff]
          %v658 = vld [vmem:[%s619 + $0x80] sm:$0xff]
          %v659 = vld [vmem:[%s619 + $0x88] sm:$0xff]
          %v660 = vld [vmem:[%s619 + $0x90] sm:$0xff]
          %v661 = vld [vmem:[%s619 + $0x98] sm:$0xff]
          %v662 = vld [vmem:[%s619 + $0xa0] sm:$0xff]
          %v663 = vld [vmem:[%s619 + $0xa8] sm:$0xff]
          %v664 = vld [vmem:[%s619 + $0xb0] sm:$0xff]
          %v665 = vld [vmem:[%s619 + $0xb8] sm:$0xff]
          %v666 = vld [vmem:[%s619 + $0xc0] sm:$0xff]
          %v667 = vld [vmem:[%s619 + $0xc8] sm:$0xff]
          %v668 = vld [vmem:[%s619 + $0xd0] sm:$0xff]
          %v669 = vld [vmem:[%s619 + $0xd8] sm:$0xff]
          %v670 = vld [vmem:[%s619 + $0xe0] sm:$0xff]
          %v671 = vld [vmem:[%s619 + $0xe8] sm:$0xff]
          %v672 = vld [vmem:[%s619 + $0xf0] sm:$0xff]
          %v673 = vld [vmem:[%s619 + $0xf8] sm:$0xff]
          %v674 = vld [vmem:[%s619 + $0x100] sm:$0xff]
          %v675 = vld [vmem:[%s619 + $0x108] sm:$0xff]
          %v676 = vld [vmem:[%s619 + $0x110] sm:$0xff]
          %v677 = vld [vmem:[%s619 + $0x118] sm:$0xff]
          %v678 = vld [vmem:[%s619 + $0x120] sm:$0xff]
          %v679 = vld [vmem:[%s619 + $0x128] sm:$0xff]
          %v680 = vld [vmem:[%s619 + $0x130] sm:$0xff]
          %v681 = vld [vmem:[%s619 + $0x138] sm:$0xff]
          %v682 = vld [vmem:[%s619 + $0x140] sm:$0xff]
          %v683 = vld [vmem:[%s619 + $0x148] sm:$0xff]
          %v684 = vld [vmem:[%s619 + $0x150] sm:$0xff]
          %v685 = vld [vmem:[%s619 + $0x158] sm:$0xff]
          %v686 = vld [vmem:[%s619 + $0x160] sm:$0xff]
          %v687 = vld [vmem:[%s619 + $0x168] sm:$0xff]
          %v688 = vld [vmem:[%s619 + $0x170] sm:$0xff]
          %v689 = vld [vmem:[%s619 + $0x178] sm:$0xff]
          %v690 = vld [vmem:[%s619 + $0x180] sm:$0xff]
          %v691 = vld [vmem:[%s619 + $0x188] sm:$0xff]
          %v692 = vld [vmem:[%s619 + $0x190] sm:$0xff]
          %v693 = vld [vmem:[%s619 + $0x198] sm:$0xff]
          %v694 = vld [vmem:[%s619 + $0x1a0] sm:$0xff]
          %v695 = vld [vmem:[%s619 + $0x1a8] sm:$0xff]
          %v696 = vld [vmem:[%s619 + $0x1b0] sm:$0xff]
          %v697 = vld [vmem:[%s619 + $0x1b8] sm:$0xff]
          %v698 = vld [vmem:[%s619 + $0x1c0] sm:$0xff]
          %v699 = vld [vmem:[%s619 + $0x1c8] sm:$0xff]
          %v700 = vld [vmem:[%s619 + $0x1d0] sm:$0xff]
          %v701 = vld [vmem:[%s619 + $0x1d8] sm:$0xff]
          %v702 = vld [vmem:[%s619 + $0x1e0] sm:$0xff]
          %v703 = vld [vmem:[%s619 + $0x1e8] sm:$0xff]
          %v704 = vld [vmem:[%s619 + $0x1f0] sm:$0xff]
          %v705 = vld [vmem:[%s619 + $0x1f8] sm:$0xff]
          %v706 = vpack.c.bf16 %v643, %v642
          %v707 = vpack.c.bf16 %v645, %v644
          %v708 = vpack.c.bf16 %v647, %v646
          %v709 = vpack.c.bf16 %v649, %v648
          %v710 = vpack.c.bf16 %v651, %v650
          %v711 = vpack.c.bf16 %v653, %v652
          %v712 = vpack.c.bf16 %v655, %v654
          %v713 = vpack.c.bf16 %v657, %v656
          %v714 = vpack.c.bf16 %v659, %v658
          %v715 = vpack.c.bf16 %v661, %v660
          %v716 = vpack.c.bf16 %v663, %v662
          %v717 = vpack.c.bf16 %v665, %v664
          %v718 = vpack.c.bf16 %v667, %v666
          %v719 = vpack.c.bf16 %v669, %v668
          %v720 = vpack.c.bf16 %v671, %v670
          %v721 = vpack.c.bf16 %v673, %v672
          %v722 = vpack.c.bf16 %v675, %v674
          %v723 = vpack.c.bf16 %v677, %v676
          %v724 = vpack.c.bf16 %v679, %v678
          %v725 = vpack.c.bf16 %v681, %v680
          %v726 = vpack.c.bf16 %v683, %v682
          %v727 = vpack.c.bf16 %v685, %v684
          %v728 = vpack.c.bf16 %v687, %v686
          %v729 = vpack.c.bf16 %v689, %v688
          %v730 = vpack.c.bf16 %v691, %v690
          %v731 = vpack.c.bf16 %v693, %v692
          %v732 = vpack.c.bf16 %v695, %v694
          %v733 = vpack.c.bf16 %v697, %v696
          %v734 = vpack.c.bf16 %v699, %v698
          %v735 = vpack.c.bf16 %v701, %v700
          %v736 = vpack.c.bf16 %v703, %v702
          %v737 = vpack.c.bf16 %v705, %v704
          %v738 = vld [vmem:[%s4] sm:$0xff]
          %v739 = vld [vmem:[%s4 + $0x8] sm:$0xff]
          %v740 = vld [vmem:[%s4 + $0x10] sm:$0xff]
          %v741 = vld [vmem:[%s4 + $0x18] sm:$0xff]
          %v742 = vld [vmem:[%s4 + $0x20] sm:$0xff]
          %v743 = vld [vmem:[%s4 + $0x28] sm:$0xff]
          %745 = vset.pattern.permute.xlu0 0
          %746 = vperm.xlu0 %745, %v738
          %v747 = vpop.permute.xlu0 %746
          %750 = vset.pattern.permute.xlu0 0
          %751 = vperm.xlu0 %750, %v739
          %v752 = vpop.permute.xlu0 %751
          %755 = vset.pattern.permute.xlu0 0
          %756 = vperm.xlu0 %755, %v740
          %v757 = vpop.permute.xlu0 %756
          %760 = vset.pattern.permute.xlu0 0
          %761 = vperm.xlu0 %760, %v741
          %v762 = vpop.permute.xlu0 %761
          %765 = vset.pattern.permute.xlu0 0
          %766 = vperm.xlu0 %765, %v742
          %v767 = vpop.permute.xlu0 %766
          %770 = vset.pattern.permute.xlu0 0
          %771 = vperm.xlu0 %770, %v743
          %v772 = vpop.permute.xlu0 %771
          %v786 = vunpack.c.l.b16 %v630
          %v787 = vunpack.c.h.b16 %v630
          %v788 = vunpack.c.l.b16 %v631
          %v789 = vunpack.c.h.b16 %v631
          %v790 = vunpack.c.l.b16 %v632
          %v791 = vunpack.c.h.b16 %v632
          %v792 = vunpack.c.l.b16 %v633
          %v793 = vunpack.c.h.b16 %v633
          %v794 = vunpack.c.l.b16 %v634
          %v795 = vunpack.c.h.b16 %v634
          %v796 = vunpack.c.l.b16 %v635
          %v797 = vunpack.c.h.b16 %v635
          %v798 = vunpack.c.l.b16 %v636
          %v799 = vunpack.c.h.b16 %v636
          %v800 = vunpack.c.l.b16 %v637
          %v801 = vunpack.c.h.b16 %v637
          %v802 = vunpack.c.l.b16 %v638
          %v803 = vunpack.c.h.b16 %v638
          %v804 = vunpack.c.l.b16 %v639
          %v805 = vunpack.c.h.b16 %v639
          %v806 = vunpack.c.l.b16 %v640
          %v807 = vunpack.c.h.b16 %v640
          %v808 = vunpack.c.l.b16 %v641
          %v809 = vunpack.c.h.b16 %v641
          %v810 = vpack.c.b16 %v790, %v786
          %v811 = vpack.c.b16 %v791, %v787
          %v812 = vpack.c.b16 %v792, %v788
          %v813 = vpack.c.b16 %v793, %v789
          %v814 = vpack.c.b16 %v798, %v794
          %v815 = vpack.c.b16 %v799, %v795
          %v816 = vpack.c.b16 %v800, %v796
          %v817 = vpack.c.b16 %v801, %v797
          %v818 = vpack.c.b16 %v806, %v802
          %v819 = vpack.c.b16 %v807, %v803
          %v820 = vpack.c.b16 %v808, %v804
          %v821 = vpack.c.b16 %v809, %v805
          %834 = vmatprep.subr.bf16.mxu0 0
          %835 = vmatpush1.bf16.msra.mxu0 %v706
          %836 = vmatprep.subr.bf16.mxu0 0
          %837 = vmatpush1.bf16.msra.mxu0 %v707
          %838 = vmatprep.subr.bf16.mxu0 0
          %839 = vmatpush1.bf16.msra.mxu0 %v708
          %840 = vmatprep.subr.bf16.mxu0 0
          %841 = vmatpush1.bf16.msra.mxu0 %v709
          %842 = vmatprep.subr.bf16.mxu0 0
          %843 = vmatpush1.bf16.msra.mxu0 %v710
          %844 = vmatprep.subr.bf16.mxu0 0
          %845 = vmatpush1.bf16.msra.mxu0 %v711
          %846 = vmatprep.subr.bf16.mxu0 0
          %847 = vmatpush1.bf16.msra.mxu0 %v712
          %848 = vmatprep.subr.bf16.mxu0 0
          %849 = vmatpush1.bf16.msra.mxu0 %v713
          %850 = vmatprep.subr.bf16.mxu0 0
          %851 = vmatpush1.bf16.msra.mxu0 %v714
          %852 = vmatprep.subr.bf16.mxu0 0
          %853 = vmatpush1.bf16.msra.mxu0 %v715
          %854 = vmatprep.subr.bf16.mxu0 0
          %855 = vmatpush1.bf16.msra.mxu0 %v716
          %856 = vmatprep.subr.bf16.mxu0 0
          %857 = vmatpush1.bf16.msra.mxu0 %v717
          %858 = vmatprep.subr.bf16.mxu0 0
          %859 = vmatpush1.bf16.msra.mxu0 %v718
          %860 = vmatprep.subr.bf16.mxu0 0
          %861 = vmatpush1.bf16.msra.mxu0 %v719
          %862 = vmatprep.subr.bf16.mxu0 0
          %863 = vmatpush1.bf16.msra.mxu0 %v720
          %864 = vmatprep.subr.bf16.mxu0 0
          %865 = vmatpush1.bf16.msra.mxu0 %v721
          %866 = vmatprep.mubr.bf16.mxu0 %v811
          %867 = vmatmul.mubr.bf16.gmra.mrb[0].mxu0 %v810
          %v868 = vpop.f32.mrb[0].mxu0
          %v869 = vadd.f32 %v747, %v868
          %v870 = vpop.f32.mrb[0].mxu0
          %v871 = vpop.f32.mrb[0].mxu0
          %v872 = vadd.f32 %v752, %v871
          %v873 = vpop.f32.mrb[0].mxu0
          %874 = vmatprep.mubr.bf16.mxu0 %v815
          %875 = vmatmul.mubr.bf16.gmra.mrb[0].mxu0 %v814
          %v876 = vpop.f32.mrb[0].mxu0
          %v877 = vadd.f32 %v757, %v876
          %v878 = vpop.f32.mrb[0].mxu0
          %v879 = vpop.f32.mrb[0].mxu0
          %v880 = vadd.f32 %v762, %v879
          %v881 = vpop.f32.mrb[0].mxu0
          %882 = vmatprep.mubr.bf16.mxu0 %v819
          %883 = vmatmul.mubr.bf16.gmra.mrb[0].mxu0 %v818
          %v884 = vpop.f32.mrb[0].mxu0
          %v885 = vadd.f32 %v767, %v884
          %v886 = vpop.f32.mrb[0].mxu0
          %v887 = vpop.f32.mrb[0].mxu0
          %v888 = vadd.f32 %v772, %v887
          %v889 = vpop.f32.mrb[0].mxu0
          %890 = vdwg.mxu0
          %891 = vmatprep.subr.bf16.mxu0 0
          %892 = vmatpush1.bf16.msra.mxu0 %v722
          %893 = vmatprep.subr.bf16.mxu0 0
          %894 = vmatpush1.bf16.msra.mxu0 %v723
          %895 = vmatprep.subr.bf16.mxu0 0
          %896 = vmatpush1.bf16.msra.mxu0 %v724
          %897 = vmatprep.subr.bf16.mxu0 0
          %898 = vmatpush1.bf16.msra.mxu0 %v725
          %899 = vmatprep.subr.bf16.mxu0 0
          %900 = vmatpush1.bf16.msra.mxu0 %v726
          %901 = vmatprep.subr.bf16.mxu0 0
          %902 = vmatpush1.bf16.msra.mxu0 %v727
          %903 = vmatprep.subr.bf16.mxu0 0
          %904 = vmatpush1.bf16.msra.mxu0 %v728
          %905 = vmatprep.subr.bf16.mxu0 0
          %906 = vmatpush1.bf16.msra.mxu0 %v729
          %907 = vmatprep.subr.bf16.mxu0 0
          %908 = vmatpush1.bf16.msra.mxu0 %v730
          %909 = vmatprep.subr.bf16.mxu0 0
          %910 = vmatpush1.bf16.msra.mxu0 %v731
          %911 = vmatprep.subr.bf16.mxu0 0
          %912 = vmatpush1.bf16.msra.mxu0 %v732
          %913 = vmatprep.subr.bf16.mxu0 0
          %914 = vmatpush1.bf16.msra.mxu0 %v733
          %915 = vmatprep.subr.bf16.mxu0 0
          %916 = vmatpush1.bf16.msra.mxu0 %v734
          %917 = vmatprep.subr.bf16.mxu0 0
          %918 = vmatpush1.bf16.msra.mxu0 %v735
          %919 = vmatprep.subr.bf16.mxu0 0
          %920 = vmatpush1.bf16.msra.mxu0 %v736
          %921 = vmatprep.subr.bf16.mxu0 0
          %922 = vmatpush1.bf16.msra.mxu0 %v737
          %923 = vmatprep.mubr.bf16.mxu0 %v813
          %924 = vmatmul.mubr.bf16.gmra.mrb[0].mxu0 %v812
          %v925 = vpop.f32.mrb[0].mxu0
          %v926 = vadd.f32 %v869, %v925
          %v927 = vpop.f32.mrb[0].mxu0
          %v928 = vpop.f32.mrb[0].mxu0
          %v929 = vadd.f32 %v872, %v928
          %v930 = vpop.f32.mrb[0].mxu0
          %931 = vmatprep.mubr.bf16.mxu0 %v817
          %932 = vmatmul.mubr.bf16.gmra.mrb[0].mxu0 %v816
          %v933 = vpop.f32.mrb[0].mxu0
          %v934 = vadd.f32 %v877, %v933
          %v935 = vpop.f32.mrb[0].mxu0
          %v936 = vpop.f32.mrb[0].mxu0
          %v937 = vadd.f32 %v880, %v936
          %v938 = vpop.f32.mrb[0].mxu0
          %939 = vmatprep.mubr.bf16.mxu0 %v821
          %940 = vmatmul.mubr.bf16.gmra.mrb[0].mxu0 %v820
          %v941 = vpop.f32.mrb[0].mxu0
          %v942 = vadd.f32 %v885, %v941
          %v943 = vpop.f32.mrb[0].mxu0
          %v944 = vpop.f32.mrb[0].mxu0
          %v945 = vadd.f32 %v888, %v944
          %v946 = vpop.f32.mrb[0].mxu0
          %947 = vdwg.mxu0
          %v948 = vld [vmem:[%s6] sm:$0xff]
          %v949 = vld [vmem:[%s6 + $0x8] sm:$0xff]
          %v950 = vld [vmem:[%s6 + $0x10] sm:$0xff]
          %v951 = vld [vmem:[%s6 + $0x18] sm:$0xff]
          %v952 = vld [vmem:[%s6 + $0x20] sm:$0xff]
          %v953 = vld [vmem:[%s6 + $0x28] sm:$0xff]
          %v954 = vld [vmem:[%s6 + $0x30] sm:$0xff]
          %v955 = vld [vmem:[%s6 + $0x38] sm:$0xff]
          %v956 = vld [vmem:[%s6 + $0x40] sm:$0xff]
          %v957 = vld [vmem:[%s6 + $0x48] sm:$0xff]
          %v958 = vld [vmem:[%s6 + $0x50] sm:$0xff]
          %v959 = vld [vmem:[%s6 + $0x58] sm:$0xff]
          %v960 = vld [vmem:[%s6 + $0x60] sm:$0xff]
          %v961 = vld [vmem:[%s6 + $0x68] sm:$0xff]
          %v962 = vld [vmem:[%s6 + $0x70] sm:$0xff]
          %v963 = vld [vmem:[%s6 + $0x78] sm:$0xff]
          %v964 = vld [vmem:[%s6 + $0x80] sm:$0xff]
          %v965 = vld [vmem:[%s6 + $0x88] sm:$0xff]
          %v966 = vld [vmem:[%s6 + $0x90] sm:$0xff]
          %v967 = vld [vmem:[%s6 + $0x98] sm:$0xff]
          %v968 = vld [vmem:[%s6 + $0xa0] sm:$0xff]
          %v969 = vld [vmem:[%s6 + $0xa8] sm:$0xff]
          %v970 = vld [vmem:[%s6 + $0xb0] sm:$0xff]
          %v971 = vld [vmem:[%s6 + $0xb8] sm:$0xff]
          %v972 = vld [vmem:[%s624] sm:$0xff]
          %v973 = vld [vmem:[%s624 + $0x8] sm:$0xff]
          %v974 = vld [vmem:[%s624 + $0x10] sm:$0xff]
          %v975 = vld [vmem:[%s624 + $0x18] sm:$0xff]
          %v976 = vld [vmem:[%s624 + $0x20] sm:$0xff]
          %v977 = vld [vmem:[%s624 + $0x28] sm:$0xff]
          %v978 = vld [vmem:[%s624 + $0x30] sm:$0xff]
          %v979 = vld [vmem:[%s624 + $0x38] sm:$0xff]
          %v980 = vld [vmem:[%s624 + $0x40] sm:$0xff]
          %v981 = vld [vmem:[%s624 + $0x48] sm:$0xff]
          %v982 = vld [vmem:[%s624 + $0x50] sm:$0xff]
          %v983 = vld [vmem:[%s624 + $0x58] sm:$0xff]
          %v984 = vld [vmem:[%s624 + $0x60] sm:$0xff]
          %v985 = vld [vmem:[%s624 + $0x68] sm:$0xff]
          %v986 = vld [vmem:[%s624 + $0x70] sm:$0xff]
          %v987 = vld [vmem:[%s624 + $0x78] sm:$0xff]
          %v988 = vld [vmem:[%s624 + $0x80] sm:$0xff]
          %v989 = vld [vmem:[%s624 + $0x88] sm:$0xff]
          %v990 = vld [vmem:[%s624 + $0x90] sm:$0xff]
          %v991 = vld [vmem:[%s624 + $0x98] sm:$0xff]
          %v992 = vld [vmem:[%s624 + $0xa0] sm:$0xff]
          %v993 = vld [vmem:[%s624 + $0xa8] sm:$0xff]
          %v994 = vld [vmem:[%s624 + $0xb0] sm:$0xff]
          %v995 = vld [vmem:[%s624 + $0xb8] sm:$0xff]
          %v996 = vld [vmem:[%s624 + $0xc0] sm:$0xff]
          %v997 = vld [vmem:[%s624 + $0xc8] sm:$0xff]
          %v998 = vld [vmem:[%s624 + $0xd0] sm:$0xff]
          %v999 = vld [vmem:[%s624 + $0xd8] sm:$0xff]
          %v1000 = vld [vmem:[%s624 + $0xe0] sm:$0xff]
          %v1001 = vld [vmem:[%s624 + $0xe8] sm:$0xff]
          %v1002 = vld [vmem:[%s624 + $0xf0] sm:$0xff]
          %v1003 = vld [vmem:[%s624 + $0xf8] sm:$0xff]
          %v1004 = vld [vmem:[%s624 + $0x100] sm:$0xff]
          %v1005 = vld [vmem:[%s624 + $0x108] sm:$0xff]
          %v1006 = vld [vmem:[%s624 + $0x110] sm:$0xff]
          %v1007 = vld [vmem:[%s624 + $0x118] sm:$0xff]
          %v1008 = vld [vmem:[%s624 + $0x120] sm:$0xff]
          %v1009 = vld [vmem:[%s624 + $0x128] sm:$0xff]
          %v1010 = vld [vmem:[%s624 + $0x130] sm:$0xff]
          %v1011 = vld [vmem:[%s624 + $0x138] sm:$0xff]
          %v1012 = vld [vmem:[%s624 + $0x140] sm:$0xff]
          %v1013 = vld [vmem:[%s624 + $0x148] sm:$0xff]
          %v1014 = vld [vmem:[%s624 + $0x150] sm:$0xff]
          %v1015 = vld [vmem:[%s624 + $0x158] sm:$0xff]
          %v1016 = vld [vmem:[%s624 + $0x160] sm:$0xff]
          %v1017 = vld [vmem:[%s624 + $0x168] sm:$0xff]
          %v1018 = vld [vmem:[%s624 + $0x170] sm:$0xff]
          %v1019 = vld [vmem:[%s624 + $0x178] sm:$0xff]
          %v1020 = vld [vmem:[%s624 + $0x180] sm:$0xff]
          %v1021 = vld [vmem:[%s624 + $0x188] sm:$0xff]
          %v1022 = vld [vmem:[%s624 + $0x190] sm:$0xff]
          %v1023 = vld [vmem:[%s624 + $0x198] sm:$0xff]
          %v1024 = vld [vmem:[%s624 + $0x1a0] sm:$0xff]
          %v1025 = vld [vmem:[%s624 + $0x1a8] sm:$0xff]
          %v1026 = vld [vmem:[%s624 + $0x1b0] sm:$0xff]
          %v1027 = vld [vmem:[%s624 + $0x1b8] sm:$0xff]
          %v1028 = vld [vmem:[%s624 + $0x1c0] sm:$0xff]
          %v1029 = vld [vmem:[%s624 + $0x1c8] sm:$0xff]
          %v1030 = vld [vmem:[%s624 + $0x1d0] sm:$0xff]
          %v1031 = vld [vmem:[%s624 + $0x1d8] sm:$0xff]
          %v1032 = vld [vmem:[%s624 + $0x1e0] sm:$0xff]
          %v1033 = vld [vmem:[%s624 + $0x1e8] sm:$0xff]
          %v1034 = vld [vmem:[%s624 + $0x1f0] sm:$0xff]
          %v1035 = vld [vmem:[%s624 + $0x1f8] sm:$0xff]
          %v1036 = vld [vmem:[%s624 + $0x200] sm:$0xff]
          %v1037 = vld [vmem:[%s624 + $0x208] sm:$0xff]
          %v1038 = vld [vmem:[%s624 + $0x210] sm:$0xff]
          %v1039 = vld [vmem:[%s624 + $0x218] sm:$0xff]
          %v1040 = vld [vmem:[%s624 + $0x220] sm:$0xff]
          %v1041 = vld [vmem:[%s624 + $0x228] sm:$0xff]
          %v1042 = vld [vmem:[%s624 + $0x230] sm:$0xff]
          %v1043 = vld [vmem:[%s624 + $0x238] sm:$0xff]
          %v1044 = vld [vmem:[%s624 + $0x240] sm:$0xff]
          %v1045 = vld [vmem:[%s624 + $0x248] sm:$0xff]
          %v1046 = vld [vmem:[%s624 + $0x250] sm:$0xff]
          %v1047 = vld [vmem:[%s624 + $0x258] sm:$0xff]
          %v1048 = vld [vmem:[%s624 + $0x260] sm:$0xff]
          %v1049 = vld [vmem:[%s624 + $0x268] sm:$0xff]
          %v1050 = vld [vmem:[%s624 + $0x270] sm:$0xff]
          %v1051 = vld [vmem:[%s624 + $0x278] sm:$0xff]
          %v1052 = vld [vmem:[%s624 + $0x280] sm:$0xff]
          %v1053 = vld [vmem:[%s624 + $0x288] sm:$0xff]
          %v1054 = vld [vmem:[%s624 + $0x290] sm:$0xff]
          %v1055 = vld [vmem:[%s624 + $0x298] sm:$0xff]
          %v1056 = vld [vmem:[%s624 + $0x2a0] sm:$0xff]
          %v1057 = vld [vmem:[%s624 + $0x2a8] sm:$0xff]
          %v1058 = vld [vmem:[%s624 + $0x2b0] sm:$0xff]
          %v1059 = vld [vmem:[%s624 + $0x2b8] sm:$0xff]
          %v1060 = vld [vmem:[%s624 + $0x2c0] sm:$0xff]
          %v1061 = vld [vmem:[%s624 + $0x2c8] sm:$0xff]
          %v1062 = vld [vmem:[%s624 + $0x2d0] sm:$0xff]
          %v1063 = vld [vmem:[%s624 + $0x2d8] sm:$0xff]
          %v1064 = vld [vmem:[%s624 + $0x2e0] sm:$0xff]
          %v1065 = vld [vmem:[%s624 + $0x2e8] sm:$0xff]
          %v1066 = vld [vmem:[%s624 + $0x2f0] sm:$0xff]
          %v1067 = vld [vmem:[%s624 + $0x2f8] sm:$0xff]
          %v1068 = vld [vmem:[%s624 + $0x300] sm:$0xff]
          %v1069 = vld [vmem:[%s624 + $0x308] sm:$0xff]
          %v1070 = vld [vmem:[%s624 + $0x310] sm:$0xff]
          %v1071 = vld [vmem:[%s624 + $0x318] sm:$0xff]
          %v1072 = vld [vmem:[%s624 + $0x320] sm:$0xff]
          %v1073 = vld [vmem:[%s624 + $0x328] sm:$0xff]
          %v1074 = vld [vmem:[%s624 + $0x330] sm:$0xff]
          %v1075 = vld [vmem:[%s624 + $0x338] sm:$0xff]
          %v1076 = vld [vmem:[%s624 + $0x340] sm:$0xff]
          %v1077 = vld [vmem:[%s624 + $0x348] sm:$0xff]
          %v1078 = vld [vmem:[%s624 + $0x350] sm:$0xff]
          %v1079 = vld [vmem:[%s624 + $0x358] sm:$0xff]
          %v1080 = vld [vmem:[%s624 + $0x360] sm:$0xff]
          %v1081 = vld [vmem:[%s624 + $0x368] sm:$0xff]
          %v1082 = vld [vmem:[%s624 + $0x370] sm:$0xff]
          %v1083 = vld [vmem:[%s624 + $0x378] sm:$0xff]
          %v1084 = vld [vmem:[%s624 + $0x380] sm:$0xff]
          %v1085 = vld [vmem:[%s624 + $0x388] sm:$0xff]
          %v1086 = vld [vmem:[%s624 + $0x390] sm:$0xff]
          %v1087 = vld [vmem:[%s624 + $0x398] sm:$0xff]
          %v1088 = vld [vmem:[%s624 + $0x3a0] sm:$0xff]
          %v1089 = vld [vmem:[%s624 + $0x3a8] sm:$0xff]
          %v1090 = vld [vmem:[%s624 + $0x3b0] sm:$0xff]
          %v1091 = vld [vmem:[%s624 + $0x3b8] sm:$0xff]
          %v1092 = vld [vmem:[%s624 + $0x3c0] sm:$0xff]
          %v1093 = vld [vmem:[%s624 + $0x3c8] sm:$0xff]
          %v1094 = vld [vmem:[%s624 + $0x3d0] sm:$0xff]
          %v1095 = vld [vmem:[%s624 + $0x3d8] sm:$0xff]
          %v1096 = vld [vmem:[%s624 + $0x3e0] sm:$0xff]
          %v1097 = vld [vmem:[%s624 + $0x3e8] sm:$0xff]
          %v1098 = vld [vmem:[%s624 + $0x3f0] sm:$0xff]
          %v1099 = vld [vmem:[%s624 + $0x3f8] sm:$0xff]
          %v1100 = vpack.c.bf16 %v973, %v972
          %v1101 = vpack.c.bf16 %v975, %v974
          %v1102 = vpack.c.bf16 %v977, %v976
          %v1103 = vpack.c.bf16 %v979, %v978
          %v1104 = vpack.c.bf16 %v981, %v980
          %v1105 = vpack.c.bf16 %v983, %v982
          %v1106 = vpack.c.bf16 %v985, %v984
          %v1107 = vpack.c.bf16 %v987, %v986
          %v1108 = vpack.c.bf16 %v989, %v988
          %v1109 = vpack.c.bf16 %v991, %v990
          %v1110 = vpack.c.bf16 %v993, %v992
          %v1111 = vpack.c.bf16 %v995, %v994
          %v1112 = vpack.c.bf16 %v997, %v996
          %v1113 = vpack.c.bf16 %v999, %v998
          %v1114 = vpack.c.bf16 %v1001, %v1000
          %v1115 = vpack.c.bf16 %v1003, %v1002
          %v1116 = vpack.c.bf16 %v1005, %v1004
          %v1117 = vpack.c.bf16 %v1007, %v1006
          %v1118 = vpack.c.bf16 %v1009, %v1008
          %v1119 = vpack.c.bf16 %v1011, %v1010
          %v1120 = vpack.c.bf16 %v1013, %v1012
          %v1121 = vpack.c.bf16 %v1015, %v1014
          %v1122 = vpack.c.bf16 %v1017, %v1016
          %v1123 = vpack.c.bf16 %v1019, %v1018
          %v1124 = vpack.c.bf16 %v1021, %v1020
          %v1125 = vpack.c.bf16 %v1023, %v1022
          %v1126 = vpack.c.bf16 %v1025, %v1024
          %v1127 = vpack.c.bf16 %v1027, %v1026
          %v1128 = vpack.c.bf16 %v1029, %v1028
          %v1129 = vpack.c.bf16 %v1031, %v1030
          %v1130 = vpack.c.bf16 %v1033, %v1032
          %v1131 = vpack.c.bf16 %v1035, %v1034
          %v1132 = vpack.c.bf16 %v1037, %v1036
          %v1133 = vpack.c.bf16 %v1039, %v1038
          %v1134 = vpack.c.bf16 %v1041, %v1040
          %v1135 = vpack.c.bf16 %v1043, %v1042
          %v1136 = vpack.c.bf16 %v1045, %v1044
          %v1137 = vpack.c.bf16 %v1047, %v1046
          %v1138 = vpack.c.bf16 %v1049, %v1048
          %v1139 = vpack.c.bf16 %v1051, %v1050
          %v1140 = vpack.c.bf16 %v1053, %v1052
          %v1141 = vpack.c.bf16 %v1055, %v1054
          %v1142 = vpack.c.bf16 %v1057, %v1056
          %v1143 = vpack.c.bf16 %v1059, %v1058
          %v1144 = vpack.c.bf16 %v1061, %v1060
          %v1145 = vpack.c.bf16 %v1063, %v1062
          %v1146 = vpack.c.bf16 %v1065, %v1064
          %v1147 = vpack.c.bf16 %v1067, %v1066
          %v1148 = vpack.c.bf16 %v1069, %v1068
          %v1149 = vpack.c.bf16 %v1071, %v1070
          %v1150 = vpack.c.bf16 %v1073, %v1072
          %v1151 = vpack.c.bf16 %v1075, %v1074
          %v1152 = vpack.c.bf16 %v1077, %v1076
          %v1153 = vpack.c.bf16 %v1079, %v1078
          %v1154 = vpack.c.bf16 %v1081, %v1080
          %v1155 = vpack.c.bf16 %v1083, %v1082
          %v1156 = vpack.c.bf16 %v1085, %v1084
          %v1157 = vpack.c.bf16 %v1087, %v1086
          %v1158 = vpack.c.bf16 %v1089, %v1088
          %v1159 = vpack.c.bf16 %v1091, %v1090
          %v1160 = vpack.c.bf16 %v1093, %v1092
          %v1161 = vpack.c.bf16 %v1095, %v1094
          %v1162 = vpack.c.bf16 %v1097, %v1096
          %v1163 = vpack.c.bf16 %v1099, %v1098
          %v1164 = vld [vmem:[%s7] sm:$0xff]
          %v1165 = vld [vmem:[%s7 + $0x8] sm:$0xff]
          %v1166 = vld [vmem:[%s7 + $0x10] sm:$0xff]
          %v1167 = vld [vmem:[%s7 + $0x18] sm:$0xff]
          %v1168 = vld [vmem:[%s7 + $0x20] sm:$0xff]
          %v1169 = vld [vmem:[%s7 + $0x28] sm:$0xff]
          %1171 = vset.pattern.permute.xlu0 0
          %1172 = vperm.xlu0 %1171, %v1164
          %v1173 = vpop.permute.xlu0 %1172
          %1176 = vset.pattern.permute.xlu0 0
          %1177 = vperm.xlu0 %1176, %v1165
          %v1178 = vpop.permute.xlu0 %1177
          %1181 = vset.pattern.permute.xlu0 0
          %1182 = vperm.xlu0 %1181, %v1166
          %v1183 = vpop.permute.xlu0 %1182
          %1186 = vset.pattern.permute.xlu0 0
          %1187 = vperm.xlu0 %1186, %v1167
          %v1188 = vpop.permute.xlu0 %1187
          %1191 = vset.pattern.permute.xlu0 0
          %1192 = vperm.xlu0 %1191, %v1168
          %v1193 = vpop.permute.xlu0 %1192
          %1196 = vset.pattern.permute.xlu0 0
          %1197 = vperm.xlu0 %1196, %v1169
          %v1198 = vpop.permute.xlu0 %1197
          %v1224 = vunpack.c.l.b16 %v948
          %v1225 = vunpack.c.h.b16 %v948
          %v1226 = vunpack.c.l.b16 %v949
          %v1227 = vunpack.c.h.b16 %v949
          %v1228 = vunpack.c.l.b16 %v950
          %v1229 = vunpack.c.h.b16 %v950
          %v1230 = vunpack.c.l.b16 %v951
          %v1231 = vunpack.c.h.b16 %v951
          %v1232 = vunpack.c.l.b16 %v952
          %v1233 = vunpack.c.h.b16 %v952
          %v1234 = vunpack.c.l.b16 %v953
          %v1235 = vunpack.c.h.b16 %v953
          %v1236 = vunpack.c.l.b16 %v954
          %v1237 = vunpack.c.h.b16 %v954
          %v1238 = vunpack.c.l.b16 %v955
          %v1239 = vunpack.c.h.b16 %v955
          %v1240 = vunpack.c.l.b16 %v956
          %v1241 = vunpack.c.h.b16 %v956
          %v1242 = vunpack.c.l.b16 %v957
          %v1243 = vunpack.c.h.b16 %v957
          %v1244 = vunpack.c.l.b16 %v958
          %v1245 = vunpack.c.h.b16 %v958
          %v1246 = vunpack.c.l.b16 %v959
          %v1247 = vunpack.c.h.b16 %v959
          %v1248 = vunpack.c.l.b16 %v960
          %v1249 = vunpack.c.h.b16 %v960
          %v1250 = vunpack.c.l.b16 %v961
          %v1251 = vunpack.c.h.b16 %v961
          %v1252 = vunpack.c.l.b16 %v962
          %v1253 = vunpack.c.h.b16 %v962
          %v1254 = vunpack.c.l.b16 %v963
          %v1255 = vunpack.c.h.b16 %v963
          %v1256 = vunpack.c.l.b16 %v964
          %v1257 = vunpack.c.h.b16 %v964
          %v1258 = vunpack.c.l.b16 %v965
          %v1259 = vunpack.c.h.b16 %v965
          %v1260 = vunpack.c.l.b16 %v966
          %v1261 = vunpack.c.h.b16 %v966
          %v1262 = vunpack.c.l.b16 %v967
          %v1263 = vunpack.c.h.b16 %v967
          %v1264 = vunpack.c.l.b16 %v968
          %v1265 = vunpack.c.h.b16 %v968
          %v1266 = vunpack.c.l.b16 %v969
          %v1267 = vunpack.c.h.b16 %v969
          %v1268 = vunpack.c.l.b16 %v970
          %v1269 = vunpack.c.h.b16 %v970
          %v1270 = vunpack.c.l.b16 %v971
          %v1271 = vunpack.c.h.b16 %v971
          %v1272 = vpack.c.b16 %v1232, %v1224
          %v1273 = vpack.c.b16 %v1233, %v1225
          %v1274 = vpack.c.b16 %v1234, %v1226
          %v1275 = vpack.c.b16 %v1235, %v1227
          %v1276 = vpack.c.b16 %v1236, %v1228
          %v1277 = vpack.c.b16 %v1237, %v1229
          %v1278 = vpack.c.b16 %v1238, %v1230
          %v1279 = vpack.c.b16 %v1239, %v1231
          %v1280 = vpack.c.b16 %v1248, %v1240
          %v1281 = vpack.c.b16 %v1249, %v1241
          %v1282 = vpack.c.b16 %v1250, %v1242
          %v1283 = vpack.c.b16 %v1251, %v1243
          %v1284 = vpack.c.b16 %v1252, %v1244
          %v1285 = vpack.c.b16 %v1253, %v1245
          %v1286 = vpack.c.b16 %v1254, %v1246
          %v1287 = vpack.c.b16 %v1255, %v1247
          %v1288 = vpack.c.b16 %v1264, %v1256
          %v1289 = vpack.c.b16 %v1265, %v1257
          %v1290 = vpack.c.b16 %v1266, %v1258
          %v1291 = vpack.c.b16 %v1267, %v1259
          %v1292 = vpack.c.b16 %v1268, %v1260
          %v1293 = vpack.c.b16 %v1269, %v1261
          %v1294 = vpack.c.b16 %v1270, %v1262
          %v1295 = vpack.c.b16 %v1271, %v1263
          %1320 = vmatprep.subr.bf16.mxu0 0
          %1321 = vmatpush1.bf16.msra.mxu0 %v1100
          %1322 = vmatprep.subr.bf16.mxu0 0
          %1323 = vmatpush1.bf16.msra.mxu0 %v1101
          %1324 = vmatprep.subr.bf16.mxu0 0
          %1325 = vmatpush1.bf16.msra.mxu0 %v1102
          %1326 = vmatprep.subr.bf16.mxu0 0
          %1327 = vmatpush1.bf16.msra.mxu0 %v1103
          %1328 = vmatprep.subr.bf16.mxu0 0
          %1329 = vmatpush1.bf16.msra.mxu0 %v1104
          %1330 = vmatprep.subr.bf16.mxu0 0
          %1331 = vmatpush1.bf16.msra.mxu0 %v1105
          %1332 = vmatprep.subr.bf16.mxu0 0
          %1333 = vmatpush1.bf16.msra.mxu0 %v1106
          %1334 = vmatprep.subr.bf16.mxu0 0
          %1335 = vmatpush1.bf16.msra.mxu0 %v1107
          %1336 = vmatprep.subr.bf16.mxu0 0
          %1337 = vmatpush1.bf16.msra.mxu0 %v1108
          %1338 = vmatprep.subr.bf16.mxu0 0
          %1339 = vmatpush1.bf16.msra.mxu0 %v1109
          %1340 = vmatprep.subr.bf16.mxu0 0
          %1341 = vmatpush1.bf16.msra.mxu0 %v1110
          %1342 = vmatprep.subr.bf16.mxu0 0
          %1343 = vmatpush1.bf16.msra.mxu0 %v1111
          %1344 = vmatprep.subr.bf16.mxu0 0
          %1345 = vmatpush1.bf16.msra.mxu0 %v1112
          %1346 = vmatprep.subr.bf16.mxu0 0
          %1347 = vmatpush1.bf16.msra.mxu0 %v1113
          %1348 = vmatprep.subr.bf16.mxu0 0
          %1349 = vmatpush1.bf16.msra.mxu0 %v1114
          %1350 = vmatprep.subr.bf16.mxu0 0
          %1351 = vmatpush1.bf16.msra.mxu0 %v1115
          %1352 = vmatprep.mubr.bf16.mxu0 %v1273
          %1353 = vmatmul.mubr.bf16.gmra.mrb[0].mxu0 %v1272
          %v1354 = vpop.f32.mrb[0].mxu0
          %v1355 = vadd.f32 %v1173, %v1354
          %v1356 = vpop.f32.mrb[0].mxu0
          %v1357 = vpop.f32.mrb[0].mxu0
          %v1358 = vadd.f32 %v1178, %v1357
          %v1359 = vpop.f32.mrb[0].mxu0
          %1360 = vmatprep.mubr.bf16.mxu0 %v1281
          %1361 = vmatmul.mubr.bf16.gmra.mrb[0].mxu0 %v1280
          %v1362 = vpop.f32.mrb[0].mxu0
          %v1363 = vadd.f32 %v1183, %v1362
          %v1364 = vpop.f32.mrb[0].mxu0
          %v1365 = vpop.f32.mrb[0].mxu0
          %v1366 = vadd.f32 %v1188, %v1365
          %v1367 = vpop.f32.mrb[0].mxu0
          %1368 = vmatprep.mubr.bf16.mxu0 %v1289
          %1369 = vmatmul.mubr.bf16.gmra.mrb[0].mxu0 %v1288
          %v1370 = vpop.f32.mrb[0].mxu0
          %v1371 = vadd.f32 %v1193, %v1370
          %v1372 = vpop.f32.mrb[0].mxu0
          %v1373 = vpop.f32.mrb[0].mxu0
          %v1374 = vadd.f32 %v1198, %v1373
          %v1375 = vpop.f32.mrb[0].mxu0
          %1376 = vdwg.mxu0
          %1377 = vmatprep.subr.bf16.mxu0 0
          %1378 = vmatpush1.bf16.msra.mxu0 %v1116
          %1379 = vmatprep.subr.bf16.mxu0 0
          %1380 = vmatpush1.bf16.msra.mxu0 %v1117
          %1381 = vmatprep.subr.bf16.mxu0 0
          %1382 = vmatpush1.bf16.msra.mxu0 %v1118
          %1383 = vmatprep.subr.bf16.mxu0 0
          %1384 = vmatpush1.bf16.msra.mxu0 %v1119
          %1385 = vmatprep.subr.bf16.mxu0 0
          %1386 = vmatpush1.bf16.msra.mxu0 %v1120
          %1387 = vmatprep.subr.bf16.mxu0 0
          %1388 = vmatpush1.bf16.msra.mxu0 %v1121
          %1389 = vmatprep.subr.bf16.mxu0 0
          %1390 = vmatpush1.bf16.msra.mxu0 %v1122
          %1391 = vmatprep.subr.bf16.mxu0 0
          %1392 = vmatpush1.bf16.msra.mxu0 %v1123
          %1393 = vmatprep.subr.bf16.mxu0 0
          %1394 = vmatpush1.bf16.msra.mxu0 %v1124
          %1395 = vmatprep.subr.bf16.mxu0 0
          %1396 = vmatpush1.bf16.msra.mxu0 %v1125
          %1397 = vmatprep.subr.bf16.mxu0 0
          %1398 = vmatpush1.bf16.msra.mxu0 %v1126
          %1399 = vmatprep.subr.bf16.mxu0 0
          %1400 = vmatpush1.bf16.msra.mxu0 %v1127
          %1401 = vmatprep.subr.bf16.mxu0 0
          %1402 = vmatpush1.bf16.msra.mxu0 %v1128
          %1403 = vmatprep.subr.bf16.mxu0 0
          %1404 = vmatpush1.bf16.msra.mxu0 %v1129
          %1405 = vmatprep.subr.bf16.mxu0 0
          %1406 = vmatpush1.bf16.msra.mxu0 %v1130
          %1407 = vmatprep.subr.bf16.mxu0 0
          %1408 = vmatpush1.bf16.msra.mxu0 %v1131
          %1409 = vmatprep.mubr.bf16.mxu0 %v1275
          %1410 = vmatmul.mubr.bf16.gmra.mrb[0].mxu0 %v1274
          %v1411 = vpop.f32.mrb[0].mxu0
          %v1412 = vadd.f32 %v1355, %v1411
          %v1413 = vpop.f32.mrb[0].mxu0
          %v1414 = vpop.f32.mrb[0].mxu0
          %v1415 = vadd.f32 %v1358, %v1414
          %v1416 = vpop.f32.mrb[0].mxu0
          %1417 = vmatprep.mubr.bf16.mxu0 %v1283
          %1418 = vmatmul.mubr.bf16.gmra.mrb[0].mxu0 %v1282
          %v1419 = vpop.f32.mrb[0].mxu0
          %v1420 = vadd.f32 %v1363, %v1419
          %v1421 = vpop.f32.mrb[0].mxu0
          %v1422 = vpop.f32.mrb[0].mxu0
          %v1423 = vadd.f32 %v1366, %v1422
          %v1424 = vpop.f32.mrb[0].mxu0
          %1425 = vmatprep.mubr.bf16.mxu0 %v1291
          %1426 = vmatmul.mubr.bf16.gmra.mrb[0].mxu0 %v1290
          %v1427 = vpop.f32.mrb[0].mxu0
          %v1428 = vadd.f32 %v1371, %v1427
          %v1429 = vpop.f32.mrb[0].mxu0
          %v1430 = vpop.f32.mrb[0].mxu0
          %v1431 = vadd.f32 %v1374, %v1430
          %v1432 = vpop.f32.mrb[0].mxu0
          %1433 = vdwg.mxu0
          %1434 = vmatprep.subr.bf16.mxu0 0
          %1435 = vmatpush1.bf16.msra.mxu0 %v1132
          %1436 = vmatprep.subr.bf16.mxu0 0
          %1437 = vmatpush1.bf16.msra.mxu0 %v1133
          %1438 = vmatprep.subr.bf16.mxu0 0
          %1439 = vmatpush1.bf16.msra.mxu0 %v1134
          %1440 = vmatprep.subr.bf16.mxu0 0
          %1441 = vmatpush1.bf16.msra.mxu0 %v1135
          %1442 = vmatprep.subr.bf16.mxu0 0
          %1443 = vmatpush1.bf16.msra.mxu0 %v1136
          %1444 = vmatprep.subr.bf16.mxu0 0
          %1445 = vmatpush1.bf16.msra.mxu0 %v1137
          %1446 = vmatprep.subr.bf16.mxu0 0
          %1447 = vmatpush1.bf16.msra.mxu0 %v1138
          %1448 = vmatprep.subr.bf16.mxu0 0
          %1449 = vmatpush1.bf16.msra.mxu0 %v1139
          %1450 = vmatprep.subr.bf16.mxu0 0
          %1451 = vmatpush1.bf16.msra.mxu0 %v1140
          %1452 = vmatprep.subr.bf16.mxu0 0
          %1453 = vmatpush1.bf16.msra.mxu0 %v1141
          %1454 = vmatprep.subr.bf16.mxu0 0
          %1455 = vmatpush1.bf16.msra.mxu0 %v1142
          %1456 = vmatprep.subr.bf16.mxu0 0
          %1457 = vmatpush1.bf16.msra.mxu0 %v1143
          %1458 = vmatprep.subr.bf16.mxu0 0
          %1459 = vmatpush1.bf16.msra.mxu0 %v1144
          %1460 = vmatprep.subr.bf16.mxu0 0
          %1461 = vmatpush1.bf16.msra.mxu0 %v1145
          %1462 = vmatprep.subr.bf16.mxu0 0
          %1463 = vmatpush1.bf16.msra.mxu0 %v1146
          %1464 = vmatprep.subr.bf16.mxu0 0
          %1465 = vmatpush1.bf16.msra.mxu0 %v1147
          %1466 = vmatprep.mubr.bf16.mxu0 %v1277
          %1467 = vmatmul.mubr.bf16.gmra.mrb[0].mxu0 %v1276
          %v1468 = vpop.f32.mrb[0].mxu0
          %v1469 = vadd.f32 %v1412, %v1468
          %v1470 = vpop.f32.mrb[0].mxu0
          %v1471 = vpop.f32.mrb[0].mxu0
          %v1472 = vadd.f32 %v1415, %v1471
          %v1473 = vpop.f32.mrb[0].mxu0
          %1474 = vmatprep.mubr.bf16.mxu0 %v1285
          %1475 = vmatmul.mubr.bf16.gmra.mrb[0].mxu0 %v1284
          %v1476 = vpop.f32.mrb[0].mxu0
          %v1477 = vadd.f32 %v1420, %v1476
          %v1478 = vpop.f32.mrb[0].mxu0
          %v1479 = vpop.f32.mrb[0].mxu0
          %v1480 = vadd.f32 %v1423, %v1479
          %v1481 = vpop.f32.mrb[0].mxu0
          %1482 = vmatprep.mubr.bf16.mxu0 %v1293
          %1483 = vmatmul.mubr.bf16.gmra.mrb[0].mxu0 %v1292
          %v1484 = vpop.f32.mrb[0].mxu0
          %v1485 = vadd.f32 %v1428, %v1484
          %v1486 = vpop.f32.mrb[0].mxu0
          %v1487 = vpop.f32.mrb[0].mxu0
          %v1488 = vadd.f32 %v1431, %v1487
          %v1489 = vpop.f32.mrb[0].mxu0
          %1490 = vdwg.mxu0
          %1491 = vmatprep.subr.bf16.mxu0 0
          %1492 = vmatpush1.bf16.msra.mxu0 %v1148
          %1493 = vmatprep.subr.bf16.mxu0 0
          %1494 = vmatpush1.bf16.msra.mxu0 %v1149
          %1495 = vmatprep.subr.bf16.mxu0 0
          %1496 = vmatpush1.bf16.msra.mxu0 %v1150
          %1497 = vmatprep.subr.bf16.mxu0 0
          %1498 = vmatpush1.bf16.msra.mxu0 %v1151
          %1499 = vmatprep.subr.bf16.mxu0 0
          %1500 = vmatpush1.bf16.msra.mxu0 %v1152
          %1501 = vmatprep.subr.bf16.mxu0 0
          %1502 = vmatpush1.bf16.msra.mxu0 %v1153
          %1503 = vmatprep.subr.bf16.mxu0 0
          %1504 = vmatpush1.bf16.msra.mxu0 %v1154
          %1505 = vmatprep.subr.bf16.mxu0 0
          %1506 = vmatpush1.bf16.msra.mxu0 %v1155
          %1507 = vmatprep.subr.bf16.mxu0 0
          %1508 = vmatpush1.bf16.msra.mxu0 %v1156
          %1509 = vmatprep.subr.bf16.mxu0 0
          %1510 = vmatpush1.bf16.msra.mxu0 %v1157
          %1511 = vmatprep.subr.bf16.mxu0 0
          %1512 = vmatpush1.bf16.msra.mxu0 %v1158
          %1513 = vmatprep.subr.bf16.mxu0 0
          %1514 = vmatpush1.bf16.msra.mxu0 %v1159
          %1515 = vmatprep.subr.bf16.mxu0 0
          %1516 = vmatpush1.bf16.msra.mxu0 %v1160
          %1517 = vmatprep.subr.bf16.mxu0 0
          %1518 = vmatpush1.bf16.msra.mxu0 %v1161
          %1519 = vmatprep.subr.bf16.mxu0 0
          %1520 = vmatpush1.bf16.msra.mxu0 %v1162
          %1521 = vmatprep.subr.bf16.mxu0 0
          %1522 = vmatpush1.bf16.msra.mxu0 %v1163
          %1523 = vmatprep.mubr.bf16.mxu0 %v1279
          %1524 = vmatmul.mubr.bf16.gmra.mrb[0].mxu0 %v1278
          %v1525 = vpop.f32.mrb[0].mxu0
          %v1526 = vadd.f32 %v1469, %v1525
          %v1527 = vpop.f32.mrb[0].mxu0
          %v1528 = vpop.f32.mrb[0].mxu0
          %v1529 = vadd.f32 %v1472, %v1528
          %v1530 = vpop.f32.mrb[0].mxu0
          %1531 = vmatprep.mubr.bf16.mxu0 %v1287
          %1532 = vmatmul.mubr.bf16.gmra.mrb[0].mxu0 %v1286
          %v1533 = vpop.f32.mrb[0].mxu0
          %v1534 = vadd.f32 %v1477, %v1533
          %v1535 = vpop.f32.mrb[0].mxu0
          %v1536 = vpop.f32.mrb[0].mxu0
          %v1537 = vadd.f32 %v1480, %v1536
          %v1538 = vpop.f32.mrb[0].mxu0
          %1539 = vmatprep.mubr.bf16.mxu0 %v1295
          %1540 = vmatmul.mubr.bf16.gmra.mrb[0].mxu0 %v1294
          %v1541 = vpop.f32.mrb[0].mxu0
          %v1542 = vadd.f32 %v1485, %v1541
          %v1543 = vpop.f32.mrb[0].mxu0
          %v1544 = vpop.f32.mrb[0].mxu0
          %v1545 = vadd.f32 %v1488, %v1544
          %v1546 = vpop.f32.mrb[0].mxu0
          %1547 = vdwg.mxu0
          %v1548 = vpack.c.bf16 %v929, %v926
          %v1549 = vpack.c.bf16 %v937, %v934
          %v1550 = vpack.c.bf16 %v945, %v942
          %vm1551 = vcmask 523264
          %1552 = vst.msk [vmem:[#allocation2] sm:$0xff] %vm1551, %v1548
          %1553 = vst.msk [vmem:[#allocation2 + $0x8] sm:$0xff] %vm1551, %v1549
          %1554 = vst.msk [vmem:[#allocation2 + $0x10] sm:$0xff] %vm1551, %v1550
          %v1555 = vpack.c.bf16 %v1529, %v1526
          %v1556 = vpack.c.bf16 %v1537, %v1534
          %v1557 = vpack.c.bf16 %v1545, %v1542
          %1558 = vst.msk [vmem:[#allocation3] sm:$0xff] %vm1551, %v1555
          %1559 = vst.msk [vmem:[#allocation3 + $0x8] sm:$0xff] %vm1551, %v1556
          %1560 = vst.msk [vmem:[#allocation3 + $0x10] sm:$0xff] %vm1551, %v1557
        $region180: #{feature_fused_forward.1} parent=163 // pred_fallthru
          _
        %v1561 = vld [vmem:[%s551] sm:$0xff]
        %v1562 = vld [vmem:[%s551 + $0x8] sm:$0xff]
        %v1563 = vld [vmem:[%s551 + $0x10] sm:$0xff]
        %v1564 = vld [vmem:[%s551 + $0x18] sm:$0xff]
        %v1565 = vld [vmem:[%s551 + $0x20] sm:$0xff]
        %v1566 = vld [vmem:[%s551 + $0x28] sm:$0xff]
        %v1567 = vld [vmem:[%s551 + $0x30] sm:$0xff]
        %v1568 = vld [vmem:[%s551 + $0x38] sm:$0xff]
        %1569 = vst [vmem:[%s614] sm:$0xff] %v1561
        %1570 = vst [vmem:[%s614 + $0x8] sm:$0xff] %v1562
        %1571 = vst [vmem:[%s614 + $0x10] sm:$0xff] %v1563
        %1572 = vst [vmem:[%s614 + $0x18] sm:$0xff] %v1564
        %1573 = vst [vmem:[%s614 + $0x20] sm:$0xff] %v1565
        %1574 = vst [vmem:[%s614 + $0x28] sm:$0xff] %v1566
        %1575 = vst [vmem:[%s614 + $0x30] sm:$0xff] %v1567
        %1576 = vst [vmem:[%s614 + $0x38] sm:$0xff] %v1568
        %v1577 = vld [vmem:[#allocation3] sm:$0xff]
        %v1578 = vld [vmem:[#allocation3 + $0x8] sm:$0xff]
        %v1579 = vld [vmem:[#allocation3 + $0x10] sm:$0xff]
        %v1580 = vld [vmem:[%s565] sm:$0xf]
        %v1581 = vld [vmem:[%s565 + $0x4] sm:$0xf]
        %v1582 = vld [vmem:[%s565 + $0x8] sm:$0xf]
        %v1583 = vld [vmem:[%s565 + $0xc] sm:$0xf]
        %v1584 = vld [vmem:[%s565 + $0x10] sm:$0xf]
        %v1585 = vld [vmem:[%s565 + $0x14] sm:$0xf]
        %v1586 = vld [vmem:[%s565 + $0x18] sm:$0xf]
        %v1587 = vld [vmem:[%s565 + $0x1c] sm:$0xf]
        %v1596 = vunpack.c.l.b16 %v1580
        %v1597 = vunpack.c.l.b16 %v1581
        %v1598 = vunpack.c.l.b16 %v1582
        %v1599 = vunpack.c.l.b16 %v1583
        %v1600 = vunpack.c.l.b16 %v1584
        %v1601 = vunpack.c.l.b16 %v1585
        %v1602 = vunpack.c.l.b16 %v1586
        %v1603 = vunpack.c.l.b16 %v1587
        %v1604 = vpack.c.b16 %v1597, %v1596
        %v1605 = vpack.c.b16 %v1599, %v1598
        %v1606 = vpack.c.b16 %v1601, %v1600
        %v1607 = vpack.c.b16 %v1603, %v1602
        %vm1612 = vcmask 523264
        %v1614 = vsel %vm1612, %v1577, 0
        %v1617 = vsel %vm1612, %v1578, 0
        %v1620 = vsel %vm1612, %v1579, 0
        %1622 = vmatprep.subr.bf16.mxu0 0
        %1623 = vmatpush1.bf16.msra.mxu0 %v1604
        %1624 = vmatprep.subr.bf16.mxu0 0
        %1625 = vmatpush1.bf16.msra.mxu0 %v1605
        %1626 = vmatprep.subr.bf16.mxu0 0
        %1627 = vmatpush1.bf16.msra.mxu0 %v1606
        %1628 = vmatprep.subr.bf16.mxu0 0
        %1629 = vmatpush1.bf16.msra.mxu0 %v1607
        %1630 = vmatprep.subr.bf16.mxu0 0
        %1631 = vmatpush1.bf16.msra.mxu0 0
        %1632 = vmatprep.subr.bf16.mxu0 0
        %1633 = vmatpush1.bf16.msra.mxu0 0
        %1634 = vmatprep.subr.bf16.mxu0 0
        %1635 = vmatpush1.bf16.msra.mxu0 0
        %1636 = vmatprep.subr.bf16.mxu0 0
        %1637 = vmatpush1.bf16.msra.mxu0 0
        %1638 = vmatprep.subr.bf16.mxu0 0
        %1639 = vmatpush1.bf16.msra.mxu0 0
        %1640 = vmatprep.subr.bf16.mxu0 0
        %1641 = vmatpush1.bf16.msra.mxu0 0
        %1642 = vmatprep.subr.bf16.mxu0 0
        %1643 = vmatpush1.bf16.msra.mxu0 0
        %1644 = vmatprep.subr.bf16.mxu0 0
        %1645 = vmatpush1.bf16.msra.mxu0 0
        %1646 = vmatprep.subr.bf16.mxu0 0
        %1647 = vmatpush1.bf16.msra.mxu0 0
        %1648 = vmatprep.subr.bf16.mxu0 0
        %1649 = vmatpush1.bf16.msra.mxu0 0
        %1650 = vmatprep.subr.bf16.mxu0 0
        %1651 = vmatpush1.bf16.msra.mxu0 0
        %1652 = vmatprep.subr.bf16.mxu0 0
        %1653 = vmatpush1.bf16.msra.mxu0 0
        %1654 = vmatprep.mubr.bf16.mxu0 0
        %1655 = vmatmul.mubr.bf16.gmra.mrb[0].mxu0 %v1614
        %v1656 = vpop.f32.mrb[0].mxu0
        %v1657 = vadd.f32 0.0, %v1656
        %v1658 = vpop.f32.mrb[0].mxu0
        %v1659 = vpop.f32.mrb[0].mxu0
        %v1660 = vadd.f32 0.0, %v1659
        %v1661 = vpop.f32.mrb[0].mxu0
        %1662 = vmatprep.mubr.bf16.mxu0 0
        %1663 = vmatmul.mubr.bf16.gmra.mrb[0].mxu0 %v1617
        %v1664 = vpop.f32.mrb[0].mxu0
        %v1665 = vadd.f32 0.0, %v1664
        %v1666 = vpop.f32.mrb[0].mxu0
        %v1667 = vpop.f32.mrb[0].mxu0
        %v1668 = vadd.f32 0.0, %v1667
        %v1669 = vpop.f32.mrb[0].mxu0
        %1670 = vmatprep.mubr.bf16.mxu0 0
        %1671 = vmatmul.mubr.bf16.gmra.mrb[0].mxu0 %v1620
        %v1672 = vpop.f32.mrb[0].mxu0
        %v1673 = vadd.f32 0.0, %v1672
        %v1674 = vpop.f32.mrb[0].mxu0
        %v1675 = vpop.f32.mrb[0].mxu0
        %v1676 = vadd.f32 0.0, %v1675
        %v1677 = vpop.f32.mrb[0].mxu0
        %1678 = vdwg.mxu0
        %v1679 = vmax.f32 %v1657, 0.0
        %v1680 = vmax.f32 %v1660, 0.0
        %v1681 = vmax.f32 %v1665, 0.0
        %v1682 = vmax.f32 %v1668, 0.0
        %v1683 = vmax.f32 %v1673, 0.0
        %v1684 = vmax.f32 %v1676, 0.0
        %1685 = vst [vmem:[%s614 + $0x40] sm:$0xff] %v1679
        %1686 = vst [vmem:[%s614 + $0x48] sm:$0xff] %v1680
        %1687 = vst [vmem:[%s614 + $0x50] sm:$0xff] %v1681
        %1688 = vst [vmem:[%s614 + $0x58] sm:$0xff] %v1682
        %1689 = vst [vmem:[%s614 + $0x60] sm:$0xff] %v1683
        %1690 = vst [vmem:[%s614 + $0x68] sm:$0xff] %v1684
        %v1691 = vld [vmem:[#allocation2] sm:$0xff]
        %v1692 = vld [vmem:[#allocation2 + $0x8] sm:$0xff]
        %v1693 = vld [vmem:[#allocation2 + $0x10] sm:$0xff]
        %v1694 = vld [vmem:[%s558] sm:$0xf]
        %v1695 = vld [vmem:[%s558 + $0x4] sm:$0xf]
        %v1696 = vld [vmem:[%s558 + $0x8] sm:$0xf]
        %v1697 = vld [vmem:[%s558 + $0xc] sm:$0xf]
        %v1698 = vld [vmem:[%s558 + $0x10] sm:$0xf]
        %v1699 = vld [vmem:[%s558 + $0x14] sm:$0xf]
        %v1700 = vld [vmem:[%s558 + $0x18] sm:$0xf]
        %v1701 = vld [vmem:[%s558 + $0x1c] sm:$0xf]
        %v1710 = vunpack.c.l.b16 %v1694
        %v1711 = vunpack.c.l.b16 %v1695
        %v1712 = vunpack.c.l.b16 %v1696
        %v1713 = vunpack.c.l.b16 %v1697
        %v1714 = vunpack.c.l.b16 %v1698
        %v1715 = vunpack.c.l.b16 %v1699
        %v1716 = vunpack.c.l.b16 %v1700
        %v1717 = vunpack.c.l.b16 %v1701
        %v1718 = vpack.c.b16 %v1711, %v1710
        %v1719 = vpack.c.b16 %v1713, %v1712
        %v1720 = vpack.c.b16 %v1715, %v1714
        %v1721 = vpack.c.b16 %v1717, %v1716
        %v1727 = vsel %vm1612, %v1691, 0
        %v1730 = vsel %vm1612, %v1692, 0
        %v1733 = vsel %vm1612, %v1693, 0
        %1735 = vmatprep.subr.bf16.mxu0 0
        %1736 = vmatpush1.bf16.msra.mxu0 %v1718
        %1737 = vmatprep.subr.bf16.mxu0 0
        %1738 = vmatpush1.bf16.msra.mxu0 %v1719
        %1739 = vmatprep.subr.bf16.mxu0 0
        %1740 = vmatpush1.bf16.msra.mxu0 %v1720
        %1741 = vmatprep.subr.bf16.mxu0 0
        %1742 = vmatpush1.bf16.msra.mxu0 %v1721
        %1743 = vmatprep.subr.bf16.mxu0 0
        %1744 = vmatpush1.bf16.msra.mxu0 0
        %1745 = vmatprep.subr.bf16.mxu0 0
        %1746 = vmatpush1.bf16.msra.mxu0 0
        %1747 = vmatprep.subr.bf16.mxu0 0
        %1748 = vmatpush1.bf16.msra.mxu0 0
        %1749 = vmatprep.subr.bf16.mxu0 0
        %1750 = vmatpush1.bf16.msra.mxu0 0
        %1751 = vmatprep.subr.bf16.mxu0 0
        %1752 = vmatpush1.bf16.msra.mxu0 0
        %1753 = vmatprep.subr.bf16.mxu0 0
        %1754 = vmatpush1.bf16.msra.mxu0 0
        %1755 = vmatprep.subr.bf16.mxu0 0
        %1756 = vmatpush1.bf16.msra.mxu0 0
        %1757 = vmatprep.subr.bf16.mxu0 0
        %1758 = vmatpush1.bf16.msra.mxu0 0
        %1759 = vmatprep.subr.bf16.mxu0 0
        %1760 = vmatpush1.bf16.msra.mxu0 0
        %1761 = vmatprep.subr.bf16.mxu0 0
        %1762 = vmatpush1.bf16.msra.mxu0 0
        %1763 = vmatprep.subr.bf16.mxu0 0
        %1764 = vmatpush1.bf16.msra.mxu0 0
        %1765 = vmatprep.subr.bf16.mxu0 0
        %1766 = vmatpush1.bf16.msra.mxu0 0
        %1767 = vmatprep.mubr.bf16.mxu0 0
        %1768 = vmatmul.mubr.bf16.gmra.mrb[0].mxu0 %v1727
        %v1769 = vpop.f32.mrb[0].mxu0
        %v1770 = vadd.f32 0.0, %v1769
        %v1771 = vpop.f32.mrb[0].mxu0
        %v1772 = vpop.f32.mrb[0].mxu0
        %v1773 = vadd.f32 0.0, %v1772
        %v1774 = vpop.f32.mrb[0].mxu0
        %1775 = vmatprep.mubr.bf16.mxu0 0
        %1776 = vmatmul.mubr.bf16.gmra.mrb[0].mxu0 %v1730
        %v1777 = vpop.f32.mrb[0].mxu0
        %v1778 = vadd.f32 0.0, %v1777
        %v1779 = vpop.f32.mrb[0].mxu0
        %v1780 = vpop.f32.mrb[0].mxu0
        %v1781 = vadd.f32 0.0, %v1780
        %v1782 = vpop.f32.mrb[0].mxu0
        %1783 = vmatprep.mubr.bf16.mxu0 0
        %1784 = vmatmul.mubr.bf16.gmra.mrb[0].mxu0 %v1733
        %v1785 = vpop.f32.mrb[0].mxu0
        %v1786 = vadd.f32 0.0, %v1785
        %v1787 = vpop.f32.mrb[0].mxu0
        %v1788 = vpop.f32.mrb[0].mxu0
        %v1789 = vadd.f32 0.0, %v1788
        %v1790 = vpop.f32.mrb[0].mxu0
        %1791 = vdwg.mxu0
        %v1792 = vmax.f32 %v1770, 0.0
        %v1793 = vmax.f32 %v1773, 0.0
        %v1794 = vmax.f32 %v1778, 0.0
        %v1795 = vmax.f32 %v1781, 0.0
        %v1796 = vmax.f32 %v1786, 0.0
        %v1797 = vmax.f32 %v1789, 0.0
        %1798 = vst [vmem:[%s614 + $0x70] sm:$0xff] %v1792
        %1799 = vst [vmem:[%s614 + $0x78] sm:$0xff] %v1793
        %1800 = vst [vmem:[%s614 + $0x80] sm:$0xff] %v1794
        %1801 = vst [vmem:[%s614 + $0x88] sm:$0xff] %v1795
        %1802 = vst [vmem:[%s614 + $0x90] sm:$0xff] %v1796
        %1803 = vst [vmem:[%s614 + $0x98] sm:$0xff] %v1797
        %s1804 = sand.u32 %s258, 1
        %s1805 = sand.u32 %s258, 1
        %s1806 = smul.addr %s1805, 160
        %s1807 = scalar_lea.vmem [#allocation7], %s1806
        // Predicated region
        $region181: #{feature_fused_forward.1} parent=163 // pred_check
          %p1808 = pneg %p268
        $region182: #{feature_fused_forward.1} parent=163 // pred_check_branch
          %1810 = sbr.rel (%p1808) target = $region184
        $region183: #{feature_fused_forward.1} parent=163 // pred_region
          %s1811 = smul.addr %s24, 40
          %s1812 = sadd.s32 %s25, %s1811
          %s1813 = smul.addr %s1812, 8
          %s1814 = scalar_lea.vmem %s9, %s1813
          // Predicated region
          $region185: #{feature_fused_forward.1} parent=183 // pred_check
            _
          $region186: #{feature_fused_forward.1} parent=183 // pred_check_branch
            %1816 = sbr.rel (0) target = $region188
          $region187: #{feature_fused_forward.1} parent=183 // pred_region
            // Predicated region
            $region189: #{feature_fused_forward.1} parent=187 // pred_check
              _
            $region190: #{feature_fused_forward.1} parent=187 // pred_check_branch
              %1818 = sbr.rel (0) target = $region192
            $region191: #{feature_fused_forward.1} parent=187 // pred_region
              // Predicated region
              $region204: #{feature_fused_forward.1} parent=191 // pred_check
                _
              $region205: #{feature_fused_forward.1} parent=191 // pred_check_branch
                %1871 = sbr.rel (0) target = $region207
              $region206: #{feature_fused_forward.1} parent=191 // pred_region
                loop: start=0, step=1, limit=1
                $region208: #{feature_fused_forward.1} parent=206 // loop_pre_header
                  _
                $region209: #{feature_fused_forward.1} parent=206 // loop_header
                  %s1873 = sphi 0, %s1877
                  %p1874 = scmp.ge.s32.totalorder %s1873, 1
                  %s1878 = sphi %s1807, %s1807
                  %s1879 = sphi %s1814, %s1814
                $region210: #{feature_fused_forward.1} parent=206 // loop_header_branch
                  %1876 = sbr.rel (%p1874) target = $region214
                $region211: #{feature_fused_forward.1} parent=206 // loop_body
                  %v1880 = vld [vmem:[%s1878] sm:$0xff]
                  %1881 = vst [vmem:[%s1879] sm:$0xff] %v1880
                  %v1882 = vld [vmem:[%s1878 + $0x8] sm:$0xff]
                  %1883 = vst [vmem:[%s1879 + $0x10] sm:$0xff] %v1882
                  %v1884 = vld [vmem:[%s1878 + $0x10] sm:$0xff]
                  %1885 = vst [vmem:[%s1879 + $0x20] sm:$0xff] %v1884
                  %v1886 = vld [vmem:[%s1878 + $0x18] sm:$0xff]
                  %1887 = vst [vmem:[%s1879 + $0x30] sm:$0xff] %v1886
                  %v1888 = vld [vmem:[%s1878 + $0x20] sm:$0xff]
                  %1889 = vst [vmem:[%s1879 + $0x40] sm:$0xff] %v1888
                  %v1890 = vld [vmem:[%s1878 + $0x28] sm:$0xff]
                  %1891 = vst [vmem:[%s1879 + $0x50] sm:$0xff] %v1890
                  %v1892 = vld [vmem:[%s1878 + $0x30] sm:$0xff]
                  %1893 = vst [vmem:[%s1879 + $0x60] sm:$0xff] %v1892
                  %v1894 = vld [vmem:[%s1878 + $0x38] sm:$0xff]
                  %1895 = vst [vmem:[%s1879 + $0x70] sm:$0xff] %v1894
                  %v1896 = vld [vmem:[%s1878 + $0x40] sm:$0xff]
                  %1897 = vst [vmem:[%s1879 + $0x80] sm:$0xff] %v1896
                  %v1898 = vld [vmem:[%s1878 + $0x48] sm:$0xff]
                  %1899 = vst [vmem:[%s1879 + $0x90] sm:$0xff] %v1898
                  %v1900 = vld [vmem:[%s1878 + $0x50] sm:$0xff]
                  %1901 = vst [vmem:[%s1879 + $0xa0] sm:$0xff] %v1900
                  %v1902 = vld [vmem:[%s1878 + $0x58] sm:$0xff]
                  %1903 = vst [vmem:[%s1879 + $0xb0] sm:$0xff] %v1902
                  %v1904 = vld [vmem:[%s1878 + $0x60] sm:$0xff]
                  %1905 = vst [vmem:[%s1879 + $0xc0] sm:$0xff] %v1904
                  %v1906 = vld [vmem:[%s1878 + $0x68] sm:$0xff]
                  %1907 = vst [vmem:[%s1879 + $0xd0] sm:$0xff] %v1906
                  %v1908 = vld [vmem:[%s1878 + $0x70] sm:$0xff]
                  %1909 = vst [vmem:[%s1879 + $0xe0] sm:$0xff] %v1908
                  %v1910 = vld [vmem:[%s1878 + $0x78] sm:$0xff]
                  %1911 = vst [vmem:[%s1879 + $0xf0] sm:$0xff] %v1910
                  %v1912 = vld [vmem:[%s1878 + $0x80] sm:$0xff]
                  %1913 = vst [vmem:[%s1879 + $0x100] sm:$0xff] %v1912
                  %v1914 = vld [vmem:[%s1878 + $0x88] sm:$0xff]
                  %1915 = vst [vmem:[%s1879 + $0x110] sm:$0xff] %v1914
                  %v1916 = vld [vmem:[%s1878 + $0x90] sm:$0xff]
                  %1917 = vst [vmem:[%s1879 + $0x120] sm:$0xff] %v1916
                  %v1918 = vld [vmem:[%s1878 + $0x98] sm:$0xff]
                  %1919 = vst [vmem:[%s1879 + $0x130] sm:$0xff] %v1918
                $region212: #{feature_fused_forward.1} parent=206 // loop_footer
                  %s1877 = sadd.s32 1, %s1873
                $region213: #{feature_fused_forward.1} parent=206 // loop_footer_branch
                  %1872 = sbr.rel target = $region209
                $region214: #{feature_fused_forward.1} parent=206 // loop_exit
                  _
              $region207: #{feature_fused_forward.1} parent=191 // pred_fallthru
                _
              // Predicated region
              $region215: #{feature_fused_forward.1} parent=191 // pred_check
                _
              $region216: #{feature_fused_forward.1} parent=191 // pred_check_branch
                %1921 = sbr.rel target = $region218
              $region217: #{feature_fused_forward.1} parent=191 // pred_region
                _
              $region218: #{feature_fused_forward.1} parent=191 // pred_fallthru
                _
            $region192: #{feature_fused_forward.1} parent=187 // pred_fallthru
              _
            // Predicated region
            $region193: #{feature_fused_forward.1} parent=187 // pred_check
              _
            $region194: #{feature_fused_forward.1} parent=187 // pred_check_branch
              %1820 = sbr.rel target = $region196
            $region195: #{feature_fused_forward.1} parent=187 // pred_region
              loop: start=0, step=1, limit=1
              $region197: #{feature_fused_forward.1} parent=195 // loop_pre_header
                _
              $region198: #{feature_fused_forward.1} parent=195 // loop_header
                %s1823 = sphi 0, %s1827
                %p1824 = scmp.ge.s32.totalorder %s1823, 1
                %s1828 = sphi %s1807, %s1807
                %s1829 = sphi %s1814, %s1814
              $region199: #{feature_fused_forward.1} parent=195 // loop_header_branch
                %1826 = sbr.rel (%p1824) target = $region203
              $region200: #{feature_fused_forward.1} parent=195 // loop_body
                %v1830 = vld [vmem:[%s1828] sm:$0xff]
                %1831 = vst [vmem:[%s1829] sm:$0xff] %v1830
                %v1832 = vld [vmem:[%s1828 + $0x8] sm:$0xff]
                %1833 = vst [vmem:[%s1829 + $0x10] sm:$0xff] %v1832
                %v1834 = vld [vmem:[%s1828 + $0x10] sm:$0xff]
                %1835 = vst [vmem:[%s1829 + $0x20] sm:$0xff] %v1834
                %v1836 = vld [vmem:[%s1828 + $0x18] sm:$0xff]
                %1837 = vst [vmem:[%s1829 + $0x30] sm:$0xff] %v1836
                %v1838 = vld [vmem:[%s1828 + $0x20] sm:$0xff]
                %1839 = vst [vmem:[%s1829 + $0x40] sm:$0xff] %v1838
                %v1840 = vld [vmem:[%s1828 + $0x28] sm:$0xff]
                %1841 = vst [vmem:[%s1829 + $0x50] sm:$0xff] %v1840
                %v1842 = vld [vmem:[%s1828 + $0x30] sm:$0xff]
                %1843 = vst [vmem:[%s1829 + $0x60] sm:$0xff] %v1842
                %v1844 = vld [vmem:[%s1828 + $0x38] sm:$0xff]
                %1845 = vst [vmem:[%s1829 + $0x70] sm:$0xff] %v1844
                %v1846 = vld [vmem:[%s1828 + $0x40] sm:$0xff]
                %1847 = vst [vmem:[%s1829 + $0x80] sm:$0xff] %v1846
                %v1848 = vld [vmem:[%s1828 + $0x48] sm:$0xff]
                %1849 = vst [vmem:[%s1829 + $0x90] sm:$0xff] %v1848
                %v1850 = vld [vmem:[%s1828 + $0x50] sm:$0xff]
                %1851 = vst [vmem:[%s1829 + $0xa0] sm:$0xff] %v1850
                %v1852 = vld [vmem:[%s1828 + $0x58] sm:$0xff]
                %1853 = vst [vmem:[%s1829 + $0xb0] sm:$0xff] %v1852
                %v1854 = vld [vmem:[%s1828 + $0x60] sm:$0xff]
                %1855 = vst [vmem:[%s1829 + $0xc0] sm:$0xff] %v1854
                %v1856 = vld [vmem:[%s1828 + $0x68] sm:$0xff]
                %1857 = vst [vmem:[%s1829 + $0xd0] sm:$0xff] %v1856
                %v1858 = vld [vmem:[%s1828 + $0x70] sm:$0xff]
                %1859 = vst [vmem:[%s1829 + $0xe0] sm:$0xff] %v1858
                %v1860 = vld [vmem:[%s1828 + $0x78] sm:$0xff]
                %1861 = vst [vmem:[%s1829 + $0xf0] sm:$0xff] %v1860
                %v1862 = vld [vmem:[%s1828 + $0x80] sm:$0xff]
                %1863 = vst [vmem:[%s1829 + $0x100] sm:$0xff] %v1862
                %v1864 = vld [vmem:[%s1828 + $0x88] sm:$0xff]
                %1865 = vst [vmem:[%s1829 + $0x110] sm:$0xff] %v1864
                %v1866 = vld [vmem:[%s1828 + $0x90] sm:$0xff]
                %1867 = vst [vmem:[%s1829 + $0x120] sm:$0xff] %v1866
                %v1868 = vld [vmem:[%s1828 + $0x98] sm:$0xff]
                %1869 = vst [vmem:[%s1829 + $0x130] sm:$0xff] %v1868
              $region201: #{feature_fused_forward.1} parent=195 // loop_footer
                %s1827 = sadd.s32 1, %s1823
              $region202: #{feature_fused_forward.1} parent=195 // loop_footer_branch
                %1822 = sbr.rel target = $region198
              $region203: #{feature_fused_forward.1} parent=195 // loop_exit
                _
            $region196: #{feature_fused_forward.1} parent=187 // pred_fallthru
              _
          $region188: #{feature_fused_forward.1} parent=183 // pred_fallthru
            _
          %1922 = vnop
        $region184: #{feature_fused_forward.1} parent=163 // pred_fallthru
          _
      $region164: #{feature_fused_forward.1} parent=5 // pred_fallthru
        _
      %p1923 = scmp.le.s32.totalorder 2, %s15
      // Predicated region
      $region219: #{feature_fused_forward.1} parent=5 // pred_check
        %p1924 = pneg %p1923
      $region220: #{feature_fused_forward.1} parent=5 // pred_check_branch
        %1926 = sbr.rel (%p1924) target = $region222
      $region221: #{feature_fused_forward.1} parent=5 // pred_region
        %s1927 = ssub.s32 %s15, 2
        // Predicated region
        $region223: #{feature_fused_forward.1} parent=221 // pred_check
          %p1928 = pneg %p274
        $region224: #{feature_fused_forward.1} parent=221 // pred_check_branch
          %1930 = sbr.rel (%p1928) target = $region226
        $region225: #{feature_fused_forward.1} parent=221 // pred_region
          %s1931 = sand.u32 %s259, 1
          %s1932 = sand.u32 %s259, 1
          %s1933 = smul.addr %s1932, 160
          %s1934 = scalar_lea.vmem [#allocation7], %s1933
        $region226: #{feature_fused_forward.1} parent=221 // pred_fallthru
          _
      $region222: #{feature_fused_forward.1} parent=5 // pred_fallthru
        _
    $region6: #{feature_fused_forward.1} parent=1 // loop_footer
      %s19 = sadd.s32 1, %s15
    $region7: #{feature_fused_forward.1} parent=1 // loop_footer_branch
      %14 = sbr.rel target = $region3
    $region8: #{feature_fused_forward.1} parent=1 // loop_exit
      _

</llo_original>
